<compile_context>
chip_gen: v6e
topology: v6e:2x2x1
jax: 0.10.0
libtpu: 0.0.40
codegen_flags: <defaults>
</compile_context>

<pallas_src>
import functools

import jax
import jax.numpy as jnp
import numpy as np
from jax.experimental import pallas as pl
from jax.experimental.pallas import tpu as pltpu


def _qag_kernel(tri_ref, cen_aug_ref, pts_aug_ref, data_ref, out_ref,
                acc_ref, cnt_ref, p0_ref, *, num_slots, radius_sq):
    f32 = jnp.float32
    nt = pl.program_id(2)

    @pl.when(nt == 0)
    def _init():
        acc_ref[...] = jnp.zeros_like(acc_ref)
        cnt_ref[...] = jnp.zeros_like(cnt_ref)
        # global point 0 = ball_query pad value when a centroid has no in-radius point
        p0_ref[...] = data_ref[0][:, 0:1].astype(f32)

    cen_aug = cen_aug_ref[0]                  # (8, Kt) f32: rows [c, |c|^2, 1, 0...]
    pts_aug = pts_aug_ref[0]                  # (Nt, 8) f32: cols [-2p, 1, |p|^2, 0...]
    data = data_ref[0]                        # (DA, Nt): rows [xyz, features..., 1]
    tri = tri_ref[...]                        # (Nt, Nt) bf16, tri[n, m] = 1 iff m < n

    k_tile = cen_aug.shape[1]
    S = num_slots

    # Pairwise squared distances for this (K-tile, N-tile): a single MXU call.
    dist2 = jax.lax.dot_general(pts_aug, cen_aug, (((1,), (0,)), ((), ())),
                                preferred_element_type=f32)           # (Nt, Kt)
    mask = dist2 < radius_sq

    # Exclusive in-radius rank of every point per centroid (ball_query slot order).
    # bf16 matmul is exact here: 0/1 operands, integer result <= Nt <= 256, f32 MXU acc.
    rank_local = jax.lax.dot_general(tri, mask.astype(jnp.bfloat16),
                                     (((1,), (0,)), ((), ())),
                                     preferred_element_type=f32)      # (Nt, Kt)
    rank = rank_local.astype(jnp.int32) + cnt_ref[...]                # + carried (1, Kt)
    slot = jnp.where(mask, rank, -1)                                  # (Nt, Kt) int32

    # Per-slot one-hot gather matmuls, accumulated into the fused slot accumulator.
    # No (Nt, S*Kt) temp; each slot is a small (DA,Nt)x(Nt,Kt) MXU call.
    for s in range(S):
        w_s = (slot == s).astype(data.dtype)                          # (Nt, Kt)
        acc_ref[:, s * k_tile:(s + 1) * k_tile] += jax.lax.dot_general(
            data, w_s, (((1,), (0,)), ((), ())), preferred_element_type=f32)

    cnt_ref[...] = cnt_ref[...] + jnp.sum(mask.astype(jnp.int32), axis=0, keepdims=True)

    @pl.when(nt == pl.num_programs(2) - 1)
    def _finalize():
        DA = acc_ref.shape[0]
        DC = DA - 1                                                   # xyz + feature rows
        p0 = p0_ref[:DC, :]                                           # (DC, 1)
        vals0 = acc_ref[:DC, 0:k_tile]                                # slot-0 values
        filled0 = acc_ref[DC:DA, 0:k_tile] > 0.5                      # slot 0 got a hit
        first = jnp.where(filled0, vals0, p0)                         # ball_query pad value
        slabs = []
        for s in range(S):
            lo = s * k_tile
            vals_s = acc_ref[:DC, lo:lo + k_tile]
            filled_s = acc_ref[DC:DA, lo:lo + k_tile] > 0.5
            slabs.append(jnp.where(filled_s, vals_s, first))
        # One lane-dense store of the whole (S, DC, Kt) block.
        out_ref[0] = jnp.stack(slabs, axis=0).astype(out_ref.dtype)


def _round_up(x: int, m: int) -> int:
    return ((x + m - 1) // m) * m


def query_and_group(points, centroids, features=None, *, num_neighbors, radius,
                    relative_xyz=True, normalize_xyz=False,
                    n_tile=256, k_tile=256, vmem_limit_bytes=48 * 1024 * 1024):
    """points: (B, N, D); centroids: (B, K, D); features: (B, C, N) or None.
    Returns grouped_xyz (B, D, K, S) and grouped_features (B, C, K, S) (or None).

    Tuning notes: n_tile=128 is preferred on v5e (weaker MXU); k_tile=512 with a larger
    vmem_limit_bytes pays off on v5e/v6e (128 MiB VMEM); keep k_tile<=256 and
    vmem_limit_bytes <= ~56 MiB on v7x (64 MiB VMEM / TensorCore)."""
    B, N, D = points.shape
    K = centroids.shape[1]
    S = int(num_neighbors)

    dt = points.dtype if features is None else jnp.promote_types(points.dtype, features.dtype)

    # ---- tile sizes + padding: N and K are padded to multiples of 128-aligned tiles
    # (no full-axis fallback -> the (Nt,Nt) tri tile never scales with the problem).
    Nt = max(128, (min(int(n_tile), _round_up(N, 128)) // 128) * 128)
    N_pad = _round_up(N, Nt)
    Kt = max(128, (min(int(k_tile), _round_up(K, 128)) // 128) * 128)
    K_pad = _round_up(K, Kt)
    # v7x has 2 TensorCores: make sure the parallel grid (B * K_pad/Kt) has >= 2 tiles.
    if B == 1 and K_pad == Kt and Kt % 256 == 0:
        Kt //= 2

    # ---- gather-matmul LHS rows: [xyz, (features,), 1]; pad N columns are all-zero
    # (they are never selected).  The trailing all-ones row accumulates the per-slot
    # "filled" indicator used for ball_query padding.
    pts_cf = jnp.transpose(points, (0, 2, 1)).astype(dt)              # (B, D, N)
    ones_n = jnp.ones((B, 1, N), dt)
    if features is not None:
        data = jnp.concatenate([pts_cf, features.astype(dt), ones_n], axis=1)
    else:
        data = jnp.concatenate([pts_cf, ones_n], axis=1)
    DA = data.shape[1]
    DC = DA - 1
    if N_pad > N:
        data = jnp.pad(data, ((0, 0), (0, 0), (0, N_pad - N)))

    # ---- augmented distance operands, zero-padded to 8 rows/cols (sublane-aligned).
    AUG = 8
    pts_f = points.astype(jnp.float32)
    cen_f = centroids.astype(jnp.float32)
    BIG = jnp.float32(1e30)  # forces pad points / pad centroids outside every ball

    cen_aug = jnp.concatenate(
        [jnp.transpose(cen_f, (0, 2, 1)),
         jnp.sum(cen_f * cen_f, axis=-1)[:, None, :],
         jnp.ones((B, 1, K), jnp.float32),
         jnp.zeros((B, AUG - (D + 2), K), jnp.float32)], axis=1)      # (B, 8, K)
    if K_pad > K:
        pad_c = jnp.zeros((B, AUG, K_pad - K), jnp.float32).at[:, D, :].set(BIG)
        cen_aug = jnp.concatenate([cen_aug, pad_c], axis=2)           # (B, 8, K_pad)

    pts_aug = jnp.concatenate(
        [-2.0 * pts_f,
         jnp.ones((B, N, 1), jnp.float32),
         jnp.sum(pts_f * pts_f, axis=-1, keepdims=True),
         jnp.zeros((B, N, AUG - (D + 2)), jnp.float32)], axis=-1)     # (B, N, 8)
    if N_pad > N:
        pad_p = (jnp.zeros((B, N_pad - N, AUG), jnp.float32)
                 .at[:, :, D].set(1.0).at[:, :, D + 1].set(BIG))
        pts_aug = jnp.concatenate([pts_aug, pad_p], axis=1)           # (B, N_pad, 8)

    # ---- hoisted strictly-lower-triangular constant (bf16, DMA'd once, stays resident).
    tri_np = (np.arange(Nt)[None, :] < np.arange(Nt)[:, None])        # tri[n, m] = m < n
    tri = jnp.asarray(tri_np, dtype=jnp.bfloat16)                     # (Nt, Nt)

    kernel = functools.partial(_qag_kernel, num_slots=S, radius_sq=float(radius) ** 2)

    out = pl.pallas_call(
        kernel,
        grid=(B, K_pad // Kt, N_pad // Nt),
        in_specs=[
            pl.BlockSpec((Nt, Nt), lambda b, k, n: (0, 0)),           # tri (constant)
            pl.BlockSpec((1, AUG, Kt), lambda b, k, n: (b, 0, k)),    # cen_aug
            pl.BlockSpec((1, Nt, AUG), lambda b, k, n: (b, n, 0)),    # pts_aug
            pl.BlockSpec((1, DA, Nt), lambda b, k, n: (b, 0, n)),     # data
        ],
        out_specs=pl.BlockSpec((1, S, DC, Kt), lambda b, k, n: (b, 0, 0, k)),
        out_shape=jax.ShapeDtypeStruct((B, S, DC, K_pad), dt),
        scratch_shapes=[
            pltpu.VMEM((DA, S * Kt), jnp.float32),   # fused slot accumulators (+ filled row)
            pltpu.VMEM((1, Kt), jnp.int32),          # carried per-centroid in-radius count
            pltpu.VMEM((DA, 1), jnp.float32),        # point 0 (pad when a ball is empty)
        ],
        compiler_params=pltpu.CompilerParams(
            dimension_semantics=("parallel", "parallel", "arbitrary"),
            vmem_limit_bytes=vmem_limit_bytes,
        ),
    )(tri, cen_aug, pts_aug, data)                                    # (B, S, DC, K_pad)

    # Thin layout/post-processing on the small result (done once by XLA).
    gx = out[:, :, :D, :K]                                            # (B, S, D, K)
    if relative_xyz:
        gx = gx - jnp.transpose(centroids, (0, 2, 1)).astype(dt)[:, None, :, :]
    if normalize_xyz:
        gx = gx / radius
    grouped_xyz = jnp.transpose(gx, (0, 2, 3, 1))                     # (B, D, K, S)
    grouped_features = None
    if features is not None:
        grouped_features = jnp.transpose(out[:, :, D:, :K], (0, 2, 3, 1))  # (B, C, K, S)
    return grouped_xyz, grouped_features


# ---------------- pure-JAX reference (mirrors PyTorch/CUDA semantics) ----------------
def _ref_forward(points, centroids, features, S, radius, relative, normalize):
    B, N, D = points.shape
    K = centroids.shape[1]
    cp = jnp.einsum('bkd,bnd->bkn', centroids, points)
    c2 = jnp.sum(centroids * centroids, axis=-1)[:, :, None]
    p2 = jnp.sum(points * points, axis=-1)[:, None, :]
    dist2 = c2 + p2 - 2.0 * cp                                        # (B, K, N)
    mask = dist2 < radius ** 2
    mi = mask.astype(jnp.int32)
    rank = jnp.cumsum(mi, axis=-1) - mi
    cnt = jnp.sum(mi, axis=-1, keepdims=True)                         # (B, K, 1)
    n_iota = jnp.arange(N)
    cols = [jnp.sum(jnp.where(mask & (rank == s), n_iota, 0), axis=-1) for s in range(S)]
    idx = jnp.stack(cols, axis=-1)                                    # (B, K, S)
    idx = jnp.where(jnp.arange(S) < cnt, idx, idx[..., :1])

    gathered = jax.vmap(lambda p, i: p[i])(points, idx.reshape(B, -1))   # (B, K*S, D)
    gx = gathered.reshape(B, K, S, D).transpose(0, 3, 1, 2)              # (B, D, K, S)
    if relative:
        gx = gx - centroids.transpose(0, 2, 1)[..., None]
    if normalize:
        gx = gx / radius
    gf = None
    if features is not None:
        gf = jax.vmap(lambda f, i: f[:, i])(features, idx.reshape(B, -1))
        gf = gf.reshape(B, features.shape[1], K, S)
    return gx, gf


if __name__ == "__main__":
    def _check(B, N, D, K, C, S, radius, relative, normalize, with_features,
               n_tile=256, k_tile=256):
        key = jax.random.PRNGKey(0)
        k1, k2, k3 = jax.random.split(key, 3)
        # Quantize coordinates to a 1/32 grid so squared distances are exact in f32 and
        # the in/out-of-ball decision is identical in the kernel and the reference.
        points = jnp.round(jax.random.uniform(k1, (B, N, D), dtype=jnp.float32) * 32.0) / 32.0
        centroids = jnp.round(jax.random.uniform(k2, (B, K, D), dtype=jnp.float32) * 32.0) / 32.0
        features = (jax.random.normal(k3, (B, C, N), dtype=jnp.float32)
                    if with_features else None)

        gx, gf = query_and_group(points, centroids, features,
                                 num_neighbors=S, radius=radius,
                                 relative_xyz=relative, normalize_xyz=normalize,
                                 n_tile=n_tile, k_tile=k_tile)
        jax.block_until_ready(gx)

        gx_ref, gf_ref = _ref_forward(points, centroids, features, S, radius,
                                      relative, normalize)
        np.testing.assert_allclose(np.asarray(gx), np.asarray(gx_ref), atol=1e-5, rtol=1e-5)
        assert gx.shape == (B, D, K, S)
        if with_features:
            np.testing.assert_allclose(np.asarray(gf), np.asarray(gf_ref), atol=1e-5, rtol=1e-5)
            assert gf.shape == (B, C, K, S)
        else:
            assert gf is None

    # small shapes (exercises the N/K padding path), with features (relative + normalize)
    _check(B=2, N=16, D=3, K=8, C=4, S=4, radius=0.6,
           relative=True, normalize=True, with_features=True)
    # small radius -> exercises the "ball is empty -> pad with point 0" path, no features
    _check(B=2, N=16, D=3, K=8, C=4, S=4, radius=0.2,
           relative=True, normalize=False, with_features=False)
    # exercises N- and K-tiling and the carried count / accumulators across tiles
    _check(B=1, N=256, D=3, K=256, C=4, S=4, radius=0.26,
           relative=True, normalize=True, with_features=True, n_tile=128, k_tile=128)

    print("KERNEL_OK")
</pallas_src>

<mosaic_0001>
module attributes {stable_mosaic.version = 11 : i64} {
  func.func @_qag_kernel(%arg0: i32, %arg1: i32, %arg2: i32, %arg3: memref<128x128xbf16, #tpu.memory_space<vmem>>, %arg4: memref<1x8x128xf32, #tpu.memory_space<vmem>>, %arg5: memref<1x128x8xf32, #tpu.memory_space<vmem>>, %arg6: memref<1x8x128xf32, #tpu.memory_space<vmem>>, %arg7: memref<1x4x7x128xf32, #tpu.memory_space<vmem>>, %arg8: memref<8x512xf32, #tpu.memory_space<vmem>>, %arg9: memref<1x128xi32, #tpu.memory_space<vmem>>, %arg10: memref<8x1xf32, #tpu.memory_space<vmem>>) attributes {dimension_semantics = [#tpu.dimension_semantics<parallel>, #tpu.dimension_semantics<parallel>, #tpu.dimension_semantics<arbitrary>], iteration_bounds = array<i64: 2, 1, 1>, scalar_prefetch = 0 : i64, scratch_operands = 3 : i64, tpu.core_type = #tpu.core_type<tc>, window_params = [{pipeline_mode = #tpu.pipeline_mode<synchronous>, transform_indices = @transform_0, window_bounds = array<i64: 128, 128>}, {transform_indices = @transform_1, window_bounds = array<i64: 1, 8, 128>}, {transform_indices = @transform_2, window_bounds = array<i64: 1, 128, 8>}, {transform_indices = @transform_3, window_bounds = array<i64: 1, 8, 128>}, {transform_indices = @transform_4, window_bounds = array<i64: 1, 4, 7, 128>}]} {
    %c0_i32 = arith.constant 0 : i32
    %0 = arith.cmpi eq, %arg2, %c0_i32 : i32
    %1 = arith.extui %0 : i1 to i32
    %c0_i32_0 = arith.constant 0 : i32
    %2 = arith.cmpi ne, %1, %c0_i32_0 : i32
    scf.if %2 {
      %cst_40 = arith.constant 0.000000e+00 : f32
      %64 = vector.broadcast %cst_40 : f32 to vector<8x512xf32>
      %c0_41 = arith.constant 0 : index
      %c0_42 = arith.constant 0 : index
      %65 = vector.load %arg8[%c0_41, %c0_42] : memref<8x512xf32, #tpu.memory_space<vmem>>, vector<8x512xf32>
      tpu.vector_store %arg8[%c0_41, %c0_42], %64 {strides = array<i32>} : memref<8x512xf32, #tpu.memory_space<vmem>>, vector<8x512xf32>,
      %c0_i32_43 = arith.constant 0 : i32
      %66 = vector.broadcast %c0_i32_43 : i32 to vector<1x128xi32>
      %c0_44 = arith.constant 0 : index
      %c0_45 = arith.constant 0 : index
      %67 = vector.load %arg9[%c0_44, %c0_45] : memref<1x128xi32, #tpu.memory_space<vmem>>, vector<1x128xi32>
      tpu.vector_store %arg9[%c0_44, %c0_45], %66 {strides = array<i32>} : memref<1x128xi32, #tpu.memory_space<vmem>>, vector<1x128xi32>,
      %c0_46 = arith.constant 0 : index
      %c0_47 = arith.constant 0 : index
      %c0_48 = arith.constant 0 : index
      %68 = vector.load %arg6[%c0_46, %c0_47, %c0_48] : memref<1x8x128xf32, #tpu.memory_space<vmem>>, vector<1x8x128xf32>
      %69 = vector.shape_cast %68 : vector<1x8x128xf32> to vector<8x128xf32>
      %70 = vector.extract_strided_slice %69 {offsets = [0, 0], sizes = [8, 1], strides = [1, 1]} : vector<8x128xf32> to vector<8x1xf32>
      %c0_49 = arith.constant 0 : index
      %c0_50 = arith.constant 0 : index
      %71 = vector.load %arg10[%c0_49, %c0_50] : memref<8x1xf32, #tpu.memory_space<vmem>>, vector<8x1xf32>
      tpu.vector_store %arg10[%c0_49, %c0_50], %70 {strides = array<i32>} : memref<8x1xf32, #tpu.memory_space<vmem>>, vector<8x1xf32>,
    } else {
    }
    %c0 = arith.constant 0 : index
    %c0_1 = arith.constant 0 : index
    %c0_2 = arith.constant 0 : index
    %3 = vector.load %arg4[%c0, %c0_1, %c0_2] : memref<1x8x128xf32, #tpu.memory_space<vmem>>, vector<1x8x128xf32>
    %4 = vector.shape_cast %3 : vector<1x8x128xf32> to vector<8x128xf32>
    %c0_3 = arith.constant 0 : index
    %c0_4 = arith.constant 0 : index
    %c0_5 = arith.constant 0 : index
    %5 = vector.load %arg5[%c0_3, %c0_4, %c0_5] : memref<1x128x8xf32, #tpu.memory_space<vmem>>, vector<1x128x8xf32>
    %6 = vector.shape_cast %5 : vector<1x128x8xf32> to vector<128x8xf32>
    %c0_6 = arith.constant 0 : index
    %c0_7 = arith.constant 0 : index
    %c0_8 = arith.constant 0 : index
    %7 = vector.load %arg6[%c0_6, %c0_7, %c0_8] : memref<1x8x128xf32, #tpu.memory_space<vmem>>, vector<1x8x128xf32>
    %8 = vector.shape_cast %7 : vector<1x8x128xf32> to vector<8x128xf32>
    %c0_9 = arith.constant 0 : index
    %c0_10 = arith.constant 0 : index
    %9 = vector.load %arg3[%c0_9, %c0_10] : memref<128x128xbf16, #tpu.memory_space<vmem>>, vector<128x128xbf16>
    %cst = arith.constant dense<0.000000e+00> : vector<128x128xf32>
    %10 = tpu.matmul %6, %4, %cst {dimension_numbers = #tpu.dot_dimension_numbers<[1], [0], [0], [1], [0, 0, 1, 1], [], []>} : vector<128x8xf32>, vector<8x128xf32>, vector<128x128xf32> -> vector<128x128xf32>
    %cst_11 = arith.constant 3.600000e-01 : f32
    %11 = vector.broadcast %cst_11 : f32 to vector<128x128xf32>
    %12 = arith.cmpf olt, %10, %11 : vector<128x128xf32>
    %13 = arith.extui %12 : vector<128x128xi1> to vector<128x128xi32>
    %14 = arith.sitofp %13 : vector<128x128xi32> to vector<128x128xf32>
    %15 = arith.truncf %14 : vector<128x128xf32> to vector<128x128xbf16>
    %cst_12 = arith.constant dense<0.000000e+00> : vector<128x128xf32>
    %16 = tpu.matmul %9, %15, %cst_12 {dimension_numbers = #tpu.dot_dimension_numbers<[1], [0], [0], [1], [0, 0, 1, 1], [], []>} : vector<128x128xbf16>, vector<128x128xbf16>, vector<128x128xf32> -> vector<128x128xf32>
    %17 = arith.fptosi %16 : vector<128x128xf32> to vector<128x128xi32>
    %c0_13 = arith.constant 0 : index
    %c0_14 = arith.constant 0 : index
    %18 = vector.load %arg9[%c0_13, %c0_14] : memref<1x128xi32, #tpu.memory_space<vmem>>, vector<1x128xi32>
    %19 = vector.broadcast %18 : vector<1x128xi32> to vector<128x128xi32>
    %20 = arith.addi %17, %19 : vector<128x128xi32>
    %c-1_i32 = arith.constant -1 : i32
    %21 = vector.broadcast %c-1_i32 : i32 to vector<128x128xi32>
    %22 = arith.select %12, %20, %21 : vector<128x128xi1>, vector<128x128xi32>
    %c0_i32_15 = arith.constant 0 : i32
    %23 = vector.broadcast %c0_i32_15 : i32 to vector<128x128xi32>
    %24 = arith.cmpi eq, %22, %23 : vector<128x128xi32>
    %25 = arith.extui %24 : vector<128x128xi1> to vector<128x128xi32>
    %26 = arith.sitofp %25 : vector<128x128xi32> to vector<128x128xf32>
    %c0_16 = arith.constant 0 : index
    %c0_17 = arith.constant 0 : index
    %27 = vector.load %arg8[%c0_16, %c0_17] : memref<8x512xf32, #tpu.memory_space<vmem>>, vector<8x128xf32>
    %cst_18 = arith.constant dense<0.000000e+00> : vector<8x128xf32>
    %28 = tpu.matmul %8, %26, %cst_18 {dimension_numbers = #tpu.dot_dimension_numbers<[1], [0], [0], [1], [0, 0, 1, 1], [], []>} : vector<8x128xf32>, vector<128x128xf32>, vector<8x128xf32> -> vector<8x128xf32>
    %29 = arith.addf %27, %28 : vector<8x128xf32>
    %c0_19 = arith.constant 0 : index
    %c0_20 = arith.constant 0 : index
    %30 = vector.load %arg8[%c0_19, %c0_20] : memref<8x512xf32, #tpu.memory_space<vmem>>, vector<8x128xf32>
    tpu.vector_store %arg8[%c0_19, %c0_20], %29 {strides = array<i32>} : memref<8x512xf32, #tpu.memory_space<vmem>>, vector<8x128xf32>,
    %c1_i32 = arith.constant 1 : i32
    %31 = vector.broadcast %c1_i32 : i32 to vector<128x128xi32>
    %32 = arith.cmpi eq, %22, %31 : vector<128x128xi32>
    %33 = arith.extui %32 : vector<128x128xi1> to vector<128x128xi32>
    %34 = arith.sitofp %33 : vector<128x128xi32> to vector<128x128xf32>
    %c0_21 = arith.constant 0 : index
    %c128 = arith.constant 128 : index
    %35 = vector.load %arg8[%c0_21, %c128] : memref<8x512xf32, #tpu.memory_space<vmem>>, vector<8x128xf32>
    %cst_22 = arith.constant dense<0.000000e+00> : vector<8x128xf32>
    %36 = tpu.matmul %8, %34, %cst_22 {dimension_numbers = #tpu.dot_dimension_numbers<[1], [0], [0], [1], [0, 0, 1, 1], [], []>} : vector<8x128xf32>, vector<128x128xf32>, vector<8x128xf32> -> vector<8x128xf32>
    %37 = arith.addf %35, %36 : vector<8x128xf32>
    %c0_23 = arith.constant 0 : index
    %c128_24 = arith.constant 128 : index
    %38 = vector.load %arg8[%c0_23, %c128_24] : memref<8x512xf32, #tpu.memory_space<vmem>>, vector<8x128xf32>
    tpu.vector_store %arg8[%c0_23, %c128_24], %37 {strides = array<i32>} : memref<8x512xf32, #tpu.memory_space<vmem>>, vector<8x128xf32>,
    %c2_i32 = arith.constant 2 : i32
    %39 = vector.broadcast %c2_i32 : i32 to vector<128x128xi32>
    %40 = arith.cmpi eq, %22, %39 : vector<128x128xi32>
    %41 = arith.extui %40 : vector<128x128xi1> to vector<128x128xi32>
    %42 = arith.sitofp %41 : vector<128x128xi32> to vector<128x128xf32>
    %c0_25 = arith.constant 0 : index
    %c256 = arith.constant 256 : index
    %43 = vector.load %arg8[%c0_25, %c256] : memref<8x512xf32, #tpu.memory_space<vmem>>, vector<8x128xf32>
    %cst_26 = arith.constant dense<0.000000e+00> : vector<8x128xf32>
    %44 = tpu.matmul %8, %42, %cst_26 {dimension_numbers = #tpu.dot_dimension_numbers<[1], [0], [0], [1], [0, 0, 1, 1], [], []>} : vector<8x128xf32>, vector<128x128xf32>, vector<8x128xf32> -> vector<8x128xf32>
    %45 = arith.addf %43, %44 : vector<8x128xf32>
    %c0_27 = arith.constant 0 : index
    %c256_28 = arith.constant 256 : index
    %46 = vector.load %arg8[%c0_27, %c256_28] : memref<8x512xf32, #tpu.memory_space<vmem>>, vector<8x128xf32>
    tpu.vector_store %arg8[%c0_27, %c256_28], %45 {strides = array<i32>} : memref<8x512xf32, #tpu.memory_space<vmem>>, vector<8x128xf32>,
    %c3_i32 = arith.constant 3 : i32
    %47 = vector.broadcast %c3_i32 : i32 to vector<128x128xi32>
    %48 = arith.cmpi eq, %22, %47 : vector<128x128xi32>
    %49 = arith.extui %48 : vector<128x128xi1> to vector<128x128xi32>
    %50 = arith.sitofp %49 : vector<128x128xi32> to vector<128x128xf32>
    %c0_29 = arith.constant 0 : index
    %c384 = arith.constant 384 : index
    %51 = vector.load %arg8[%c0_29, %c384] : memref<8x512xf32, #tpu.memory_space<vmem>>, vector<8x128xf32>
    %cst_30 = arith.constant dense<0.000000e+00> : vector<8x128xf32>
    %52 = tpu.matmul %8, %50, %cst_30 {dimension_numbers = #tpu.dot_dimension_numbers<[1], [0], [0], [1], [0, 0, 1, 1], [], []>} : vector<8x128xf32>, vector<128x128xf32>, vector<8x128xf32> -> vector<8x128xf32>
    %53 = arith.addf %51, %52 : vector<8x128xf32>
    %c0_31 = arith.constant 0 : index
    %c384_32 = arith.constant 384 : index
    %54 = vector.load %arg8[%c0_31, %c384_32] : memref<8x512xf32, #tpu.memory_space<vmem>>, vector<8x128xf32>
    tpu.vector_store %arg8[%c0_31, %c384_32], %53 {strides = array<i32>} : memref<8x512xf32, #tpu.memory_space<vmem>>, vector<8x128xf32>,
    %c0_33 = arith.constant 0 : index
    %c0_34 = arith.constant 0 : index
    %55 = vector.load %arg9[%c0_33, %c0_34] : memref<1x128xi32, #tpu.memory_space<vmem>>, vector<1x128xi32>
    %56 = arith.extui %12 : vector<128x128xi1> to vector<128x128xi32>
    %cst_35 = arith.constant dense<0> : vector<128xi32>
    %57 = vector.multi_reduction <add>, %56, %cst_35 [0] : vector<128x128xi32> to vector<128xi32>
    %58 = vector.shape_cast %57 : vector<128xi32> to vector<1x128xi32>
    %59 = arith.addi %55, %58 : vector<1x128xi32>
    %c0_36 = arith.constant 0 : index
    %c0_37 = arith.constant 0 : index
    %60 = vector.load %arg9[%c0_36, %c0_37] : memref<1x128xi32, #tpu.memory_space<vmem>>, vector<1x128xi32>
    tpu.vector_store %arg9[%c0_36, %c0_37], %59 {strides = array<i32>} : memref<1x128xi32, #tpu.memory_space<vmem>>, vector<1x128xi32>,
    %c0_i32_38 = arith.constant 0 : i32
    %61 = arith.cmpi eq, %arg2, %c0_i32_38 : i32
    %62 = arith.extui %61 : i1 to i32
    %c0_i32_39 = arith.constant 0 : i32
    %63 = arith.cmpi ne, %62, %c0_i32_39 : i32
    scf.if %63 {
      %c0_40 = arith.constant 0 : index
      %c0_41 = arith.constant 0 : index
      %64 = vector.load %arg10[%c0_40, %c0_41] : memref<8x1xf32, #tpu.memory_space<vmem>>, vector<7x1xf32>
      %c0_42 = arith.constant 0 : index
      %c0_43 = arith.constant 0 : index
      %65 = vector.load %arg8[%c0_42, %c0_43] : memref<8x512xf32, #tpu.memory_space<vmem>>, vector<7x128xf32>
      %c7 = arith.constant 7 : index
      %c0_44 = arith.constant 0 : index
      %66 = vector.load %arg8[%c7, %c0_44] : memref<8x512xf32, #tpu.memory_space<vmem>>, vector<1x128xf32>
      %cst_45 = arith.constant 5.000000e-01 : f32
      %67 = vector.broadcast %cst_45 : f32 to vector<1x128xf32>
      %68 = arith.cmpf ogt, %66, %67 : vector<1x128xf32>
      %69 = vector.shape_cast %68 : vector<1x128xi1> to vector<1x128xi1>
      %70 = vector.broadcast %69 : vector<1x128xi1> to vector<7x128xi1>
      %71 = vector.shape_cast %64 : vector<7x1xf32> to vector<7x1xf32>
      %72 = vector.broadcast %71 : vector<7x1xf32> to vector<7x128xf32>
      %73 = arith.select %70, %65, %72 : vector<7x128xi1>, vector<7x128xf32>
      %c0_46 = arith.constant 0 : index
      %c0_47 = arith.constant 0 : index
      %74 = vector.load %arg8[%c0_46, %c0_47] : memref<8x512xf32, #tpu.memory_space<vmem>>, vector<7x128xf32>
      %c7_48 = arith.constant 7 : index
      %c0_49 = arith.constant 0 : index
      %75 = vector.load %arg8[%c7_48, %c0_49] : memref<8x512xf32, #tpu.memory_space<vmem>>, vector<1x128xf32>
      %cst_50 = arith.constant 5.000000e-01 : f32
      %76 = vector.broadcast %cst_50 : f32 to vector<1x128xf32>
      %77 = arith.cmpf ogt, %75, %76 : vector<1x128xf32>
      %78 = vector.shape_cast %77 : vector<1x128xi1> to vector<1x128xi1>
      %79 = vector.broadcast %78 : vector<1x128xi1> to vector<7x128xi1>
      %80 = arith.select %79, %74, %73 : vector<7x128xi1>, vector<7x128xf32>
      %c0_51 = arith.constant 0 : index
      %c128_52 = arith.constant 128 : index
      %81 = vector.load %arg8[%c0_51, %c128_52] : memref<8x512xf32, #tpu.memory_space<vmem>>, vector<7x128xf32>
      %c7_53 = arith.constant 7 : index
      %c128_54 = arith.constant 128 : index
      %82 = vector.load %arg8[%c7_53, %c128_54] : memref<8x512xf32, #tpu.memory_space<vmem>>, vector<1x128xf32>
      %cst_55 = arith.constant 5.000000e-01 : f32
      %83 = vector.broadcast %cst_55 : f32 to vector<1x128xf32>
      %84 = arith.cmpf ogt, %82, %83 : vector<1x128xf32>
      %85 = vector.shape_cast %84 : vector<1x128xi1> to vector<1x128xi1>
      %86 = vector.broadcast %85 : vector<1x128xi1> to vector<7x128xi1>
      %87 = arith.select %86, %81, %73 : vector<7x128xi1>, vector<7x128xf32>
      %c0_56 = arith.constant 0 : index
      %c256_57 = arith.constant 256 : index
      %88 = vector.load %arg8[%c0_56, %c256_57] : memref<8x512xf32, #tpu.memory_space<vmem>>, vector<7x128xf32>
      %c7_58 = arith.constant 7 : index
      %c256_59 = arith.constant 256 : index
      %89 = vector.load %arg8[%c7_58, %c256_59] : memref<8x512xf32, #tpu.memory_space<vmem>>, vector<1x128xf32>
      %cst_60 = arith.constant 5.000000e-01 : f32
      %90 = vector.broadcast %cst_60 : f32 to vector<1x128xf32>
      %91 = arith.cmpf ogt, %89, %90 : vector<1x128xf32>
      %92 = vector.shape_cast %91 : vector<1x128xi1> to vector<1x128xi1>
      %93 = vector.broadcast %92 : vector<1x128xi1> to vector<7x128xi1>
      %94 = arith.select %93, %88, %73 : vector<7x128xi1>, vector<7x128xf32>
      %c0_61 = arith.constant 0 : index
      %c384_62 = arith.constant 384 : index
      %95 = vector.load %arg8[%c0_61, %c384_62] : memref<8x512xf32, #tpu.memory_space<vmem>>, vector<7x128xf32>
      %c7_63 = arith.constant 7 : index
      %c384_64 = arith.constant 384 : index
      %96 = vector.load %arg8[%c7_63, %c384_64] : memref<8x512xf32, #tpu.memory_space<vmem>>, vector<1x128xf32>
      %cst_65 = arith.constant 5.000000e-01 : f32
      %97 = vector.broadcast %cst_65 : f32 to vector<1x128xf32>
      %98 = arith.cmpf ogt, %96, %97 : vector<1x128xf32>
      %99 = vector.shape_cast %98 : vector<1x128xi1> to vector<1x128xi1>
      %100 = vector.broadcast %99 : vector<1x128xi1> to vector<7x128xi1>
      %101 = arith.select %100, %95, %73 : vector<7x128xi1>, vector<7x128xf32>
      %102 = vector.shape_cast %80 : vector<7x128xf32> to vector<1x7x128xf32>
      %103 = vector.shape_cast %87 : vector<7x128xf32> to vector<1x7x128xf32>
      %104 = vector.shape_cast %94 : vector<7x128xf32> to vector<1x7x128xf32>
      %105 = vector.shape_cast %101 : vector<7x128xf32> to vector<1x7x128xf32>
      %106 = tpu.concatenate %102, %103, %104, %105 in 0 : vector<1x7x128xf32>, vector<1x7x128xf32>, vector<1x7x128xf32>, vector<1x7x128xf32> -> vector<4x7x128xf32>
      %c0_66 = arith.constant 0 : index
      %c0_67 = arith.constant 0 : index
      %c0_68 = arith.constant 0 : index
      %c0_69 = arith.constant 0 : index
      %107 = vector.load %arg7[%c0_66, %c0_67, %c0_68, %c0_69] : memref<1x4x7x128xf32, #tpu.memory_space<vmem>>, vector<1x4x7x128xf32>
      %108 = vector.shape_cast %107 : vector<1x4x7x128xf32> to vector<4x7x128xf32>
      %109 = vector.shape_cast %106 : vector<4x7x128xf32> to vector<1x4x7x128xf32>
      tpu.vector_store %arg7[%c0_66, %c0_67, %c0_68, %c0_69], %109 {strides = array<i32>} : memref<1x4x7x128xf32, #tpu.memory_space<vmem>>, vector<1x4x7x128xf32>,
    } else {
    }
    return
  }
  func.func @transform_0(%arg0: i32, %arg1: i32, %arg2: i32) -> (i32, i32) {
    %c0_i32 = arith.constant 0 : i32
    %c0_i32_0 = arith.constant 0 : i32
    %c0_i32_1 = arith.constant 0 : i32
    return %c0_i32, %c0_i32_0 : i32, i32
  }
  func.func @transform_1(%arg0: i32, %arg1: i32, %arg2: i32) -> (i32, i32, i32) {
    %c0_i32 = arith.constant 0 : i32
    %c0_i32_0 = arith.constant 0 : i32
    return %arg0, %c0_i32, %arg1 : i32, i32, i32
  }
  func.func @transform_2(%arg0: i32, %arg1: i32, %arg2: i32) -> (i32, i32, i32) {
    %c0_i32 = arith.constant 0 : i32
    %c0_i32_0 = arith.constant 0 : i32
    return %arg0, %arg2, %c0_i32 : i32, i32, i32
  }
  func.func @transform_3(%arg0: i32, %arg1: i32, %arg2: i32) -> (i32, i32, i32) {
    %c0_i32 = arith.constant 0 : i32
    %c0_i32_0 = arith.constant 0 : i32
    return %arg0, %c0_i32, %arg2 : i32, i32, i32
  }
  func.func @transform_4(%arg0: i32, %arg1: i32, %arg2: i32) -> (i32, i32, i32, i32) {
    %c0_i32 = arith.constant 0 : i32
    %c0_i32_0 = arith.constant 0 : i32
    %c0_i32_1 = arith.constant 0 : i32
    return %arg0, %c0_i32, %c0_i32_0, %arg1 : i32, i32, i32, i32
  }
}

</mosaic_0001>

<llo_original>
// kernel: tpu_custom_call.1
$region0: #{tpu_custom_call.1}
  #allocation0 [shape = 'u32[]', space=smem, size = 0x4, offset = 0x4, fixed_abs, tag = 'smem constant byte address 0x4 - core index']
  #allocation1 [shape = 'u32[144,128]{1,0:T(1,128)}', space=vmem, size = 0x12000, scoped, tag = 'internal scratch']
  #allocation2 [shape = 'f32[8,512]{1,0:T(8,128)}', space=vmem, size = 0x4000, scoped, tag = 'scratch operand']
  #allocation3 [shape = 's32[1,128]{1,0:T(1,128)}', space=vmem, size = 0x200, scoped, tag = 'scratch operand']
  #allocation4 [shape = 'f32[8,1]{1,0:T(8,128)}', space=vmem, size = 0x1000, scoped, tag = 'scratch operand']
  %s0 = inlined_call_operand.vmem [shape: bf16[128,128], index: 0, kind: input, shape index: {}]
  %s1 = inlined_call_operand.vmem [shape: f32[2,8,128], index: 1, kind: input, shape index: {}]
  %s2 = inlined_call_operand.vmem [shape: f32[2,128,8], index: 2, kind: input, shape index: {}]
  %s3 = inlined_call_operand.vmem [shape: f32[2,8,128], index: 3, kind: input, shape index: {}]
  %s4 = inlined_call_operand.vmem [shape: f32[2,4,7,128], index: 4, kind: output, shape index: {}]
  %s5 = sld [smem:[#allocation0]]
  $region57: #{tpu_custom_call.1} parent=0
    _
  %s7 = ssub.s32 1, %s5
  %s8 = scalar_select 0, %s7, %s5
  loop: start=0, step=1, limit=4
  $region2: #{tpu_custom_call.1} parent=0 // loop_pre_header
    _
  $region3: #{tpu_custom_call.1} parent=0 // loop_header
    %s10 = sphi 0, %s14
    %p11 = scmp.ge.s32.totalorder %s10, 4
    %s17 = sphi 0, %s36
    %s18 = sphi 0, %s32
    %s19 = sphi 0, %s28
    %s20 = sphi 0, %s17
    %s21 = sphi 0, %s18
    %s22 = sphi 0, %s19
    %s23 = sphi 0, %s20
    %s24 = sphi 0, %s21
    %s25 = sphi 0, %s22
    %s37 = sphi 0, %s37
    %s39 = sphi 0, %s37
    %s40 = sphi 0, %s39
    %s54 = sphi 0, %s40
    %s62 = sphi 0, %s64
    %s65 = sphi 0, %s62
    %s66 = sphi 0, %s65
    %s82 = sphi 0, %s66
    %s90 = sphi 0, %s92
    %s93 = sphi 0, %s90
    %s94 = sphi 0, %s93
    %s110 = sphi 0, %s94
    %s118 = sphi 0, %s120
    %s121 = sphi 0, %s118
    %s122 = sphi 0, %s121
    %s138 = sphi 0, %s122
    %s146 = sphi 0, %s148
    %s149 = sphi 0, %s146
    %s150 = sphi 0, %s149
    %s166 = sphi 0, %s150
  $region4: #{tpu_custom_call.1} parent=0 // loop_header_branch
    %13 = sbr.rel (%p11) target = $region8
  $region5: #{tpu_custom_call.1} parent=0 // loop_body
    %s15 = ssub.s32 %s10, 1
    %s16 = ssub.s32 %s10, 2
    %s26 = sadd.s32 1, %s19
    %p27 = scmp.ge.s32.totalorder %s26, 1
    %s28 = scalar_select %p27, 0, %s26
    %s29 = sadd.s32 1, %s18
    %s30 = scalar_select %p27, %s29, %s18
    %p31 = scmp.ge.s32.totalorder %s30, 1
    %s32 = scalar_select %p31, 0, %s30
    %s33 = sadd.s32 1, %s17
    %s34 = scalar_select %p31, %s33, %s17
    %p35 = scmp.ge.s32.totalorder %s34, 2
    %s36 = scalar_select %p35, 0, %s34
    %s38 = sadd.s32 %s37, 1
    %p41 = scmp.eq.s32.totalorder %s10, 1
    %p42 = scmp.ne.s32.totalorder %s37, %s39
    %p43 = scmp.eq.s32.totalorder %s10, 0
    %p44 = por %p42, %p43
    %p45 = scmp.ne.s32.totalorder %s37, %s39
    %p46 = scmp.eq.s32.totalorder %s15, 1
    %p47 = por %p45, %p46
    %p48 = scmp.ne.s32.totalorder %s39, %s40
    %p49 = scmp.eq.s32.totalorder %s15, 0
    %p50 = por %p48, %p49
    %p51 = scmp.ne.s32.totalorder %s39, %s40
    %p52 = scmp.eq.s32.totalorder %s16, 1
    %p53 = por %p51, %p52
    %p55 = scmp.ne.s32.totalorder %s40, %s54
    %p56 = scmp.eq.s32.totalorder %s16, 0
    %p57 = por %p55, %p56
    %s58 = ssub.s32 %s17, %s36
    %s59 = ssub.s32 %s18, %s32
    %s60 = sor.u32 %s58, %s59
    %p61 = scmp.eq.s32.totalorder %s60, 0
    %s63 = sadd.s32 %s62, 1
    %s64 = scalar_select %p61, %s62, %s63
    %p67 = pneg %p61
    %p68 = scmp.eq.s32.totalorder %s10, 1
    %p69 = por %p67, %p68
    %p70 = scmp.ne.s32.totalorder %s62, %s65
    %p71 = scmp.eq.s32.totalorder %s10, 0
    %p72 = por %p70, %p71
    %p73 = scmp.ne.s32.totalorder %s62, %s65
    %p74 = scmp.eq.s32.totalorder %s15, 1
    %p75 = por %p73, %p74
    %p76 = scmp.ne.s32.totalorder %s65, %s66
    %p77 = scmp.eq.s32.totalorder %s15, 0
    %p78 = por %p76, %p77
    %p79 = scmp.ne.s32.totalorder %s65, %s66
    %p80 = scmp.eq.s32.totalorder %s16, 1
    %p81 = por %p79, %p80
    %p83 = scmp.ne.s32.totalorder %s66, %s82
    %p84 = scmp.eq.s32.totalorder %s16, 0
    %p85 = por %p83, %p84
    %s86 = ssub.s32 %s17, %s36
    %s87 = ssub.s32 %s19, %s28
    %s88 = sor.u32 %s86, %s87
    %p89 = scmp.eq.s32.totalorder %s88, 0
    %s91 = sadd.s32 %s90, 1
    %s92 = scalar_select %p89, %s90, %s91
    %p95 = pneg %p89
    %p96 = scmp.eq.s32.totalorder %s10, 1
    %p97 = por %p95, %p96
    %p98 = scmp.ne.s32.totalorder %s90, %s93
    %p99 = scmp.eq.s32.totalorder %s10, 0
    %p100 = por %p98, %p99
    %p101 = scmp.ne.s32.totalorder %s90, %s93
    %p102 = scmp.eq.s32.totalorder %s15, 1
    %p103 = por %p101, %p102
    %p104 = scmp.ne.s32.totalorder %s93, %s94
    %p105 = scmp.eq.s32.totalorder %s15, 0
    %p106 = por %p104, %p105
    %p107 = scmp.ne.s32.totalorder %s93, %s94
    %p108 = scmp.eq.s32.totalorder %s16, 1
    %p109 = por %p107, %p108
    %p111 = scmp.ne.s32.totalorder %s94, %s110
    %p112 = scmp.eq.s32.totalorder %s16, 0
    %p113 = por %p111, %p112
    %s114 = ssub.s32 %s17, %s36
    %s115 = ssub.s32 %s19, %s28
    %s116 = sor.u32 %s114, %s115
    %p117 = scmp.eq.s32.totalorder %s116, 0
    %s119 = sadd.s32 %s118, 1
    %s120 = scalar_select %p117, %s118, %s119
    %p123 = pneg %p117
    %p124 = scmp.eq.s32.totalorder %s10, 1
    %p125 = por %p123, %p124
    %p126 = scmp.ne.s32.totalorder %s118, %s121
    %p127 = scmp.eq.s32.totalorder %s10, 0
    %p128 = por %p126, %p127
    %p129 = scmp.ne.s32.totalorder %s118, %s121
    %p130 = scmp.eq.s32.totalorder %s15, 1
    %p131 = por %p129, %p130
    %p132 = scmp.ne.s32.totalorder %s121, %s122
    %p133 = scmp.eq.s32.totalorder %s15, 0
    %p134 = por %p132, %p133
    %p135 = scmp.ne.s32.totalorder %s121, %s122
    %p136 = scmp.eq.s32.totalorder %s16, 1
    %p137 = por %p135, %p136
    %p139 = scmp.ne.s32.totalorder %s122, %s138
    %p140 = scmp.eq.s32.totalorder %s16, 0
    %p141 = por %p139, %p140
    %s142 = ssub.s32 %s17, %s36
    %s143 = ssub.s32 %s18, %s32
    %s144 = sor.u32 %s142, %s143
    %p145 = scmp.eq.s32.totalorder %s144, 0
    %s147 = sadd.s32 %s146, 1
    %s148 = scalar_select %p145, %s146, %s147
    %p151 = pneg %p145
    %p152 = scmp.eq.s32.totalorder %s10, 1
    %p153 = por %p151, %p152
    %p154 = scmp.ne.s32.totalorder %s146, %s149
    %p155 = scmp.eq.s32.totalorder %s10, 0
    %p156 = por %p154, %p155
    %p157 = scmp.ne.s32.totalorder %s146, %s149
    %p158 = scmp.eq.s32.totalorder %s15, 1
    %p159 = por %p157, %p158
    %p160 = scmp.ne.s32.totalorder %s149, %s150
    %p161 = scmp.eq.s32.totalorder %s15, 0
    %p162 = por %p160, %p161
    %p163 = scmp.ne.s32.totalorder %s149, %s150
    %p164 = scmp.eq.s32.totalorder %s16, 1
    %p165 = por %p163, %p164
    %p167 = scmp.ne.s32.totalorder %s150, %s166
    %p168 = scmp.eq.s32.totalorder %s16, 0
    %p169 = por %p167, %p168
    %p170 = scmp.le.s32.totalorder 1, %s10
    %p171 = scmp.lt.s32.totalorder %s10, 3
    %p172 = pnand %p170, %p171
    %p173 = pneg %p172
    // Predicated region
    $region9: #{tpu_custom_call.1} parent=5 // pred_check
      _
    $region10: #{tpu_custom_call.1} parent=5 // pred_check_branch
      %175 = sbr.rel (%p172) target = $region12
    $region11: #{tpu_custom_call.1} parent=5 // pred_region
      %s176 = ssub.s32 %s10, 1
      // Predicated region
      $region13: #{tpu_custom_call.1} parent=11 // pred_check
        %p177 = pneg %p50
      $region14: #{tpu_custom_call.1} parent=11 // pred_check_branch
        %179 = sbr.rel (%p177) target = $region16
      $region15: #{tpu_custom_call.1} parent=11 // pred_region
        _
      $region16: #{tpu_custom_call.1} parent=11 // pred_fallthru
        _
    $region12: #{tpu_custom_call.1} parent=5 // pred_fallthru
      _
    %p180 = scmp.lt.s32.totalorder %s10, 2
    // Predicated region
    $region17: #{tpu_custom_call.1} parent=5 // pred_check
      %p181 = pneg %p180
    $region18: #{tpu_custom_call.1} parent=5 // pred_check_branch
      %183 = sbr.rel (%p181) target = $region20
    $region19: #{tpu_custom_call.1} parent=5 // pred_region
      // Predicated region
      $region21: #{tpu_custom_call.1} parent=19 // pred_check
        %p184 = pneg %p72
      $region22: #{tpu_custom_call.1} parent=19 // pred_check_branch
        %186 = sbr.rel (%p184) target = $region24
      $region23: #{tpu_custom_call.1} parent=19 // pred_region
        %p187 = scmp.lt.s32.totalorder %s17, 1
        %s188 = scalar_select %p187, %s17, 1
        %p189 = scmp.lt.s32.totalorder %s18, 0
        %s190 = scalar_select %p189, %s18, 0
        %s191 = sadd.s32 %s190, %s188
        %s192 = smul.addr %s191, 8
        %s193 = scalar_lea.vmem %s1, %s192
      $region24: #{tpu_custom_call.1} parent=19 // pred_fallthru
        _
      // Predicated region
      $region25: #{tpu_custom_call.1} parent=19 // pred_check
        %p194 = pneg %p100
      $region26: #{tpu_custom_call.1} parent=19 // pred_check_branch
        %196 = sbr.rel (%p194) target = $region28
      $region27: #{tpu_custom_call.1} parent=19 // pred_region
        %s197 = smul.u32 16, %s19
        %p198 = scmp.lt.s32.totalorder %s17, 1
        %s199 = scalar_select %p198, %s17, 1
        %p200 = scmp.lt.s32.totalorder %s197, 15
        %s201 = scalar_select %p200, %s197, 15
        %s202 = smul.addr %s199, 16
        %s203 = sadd.s32 %s201, %s202
        %s204 = smul.addr %s203, 8
        %s205 = scalar_lea.vmem %s2, %s204
        %s206 = smul.u32 16, %s19
      $region28: #{tpu_custom_call.1} parent=19 // pred_fallthru
        _
      // Predicated region
      $region29: #{tpu_custom_call.1} parent=19 // pred_check
        %p207 = pneg %p128
      $region30: #{tpu_custom_call.1} parent=19 // pred_check_branch
        %209 = sbr.rel (%p207) target = $region32
      $region31: #{tpu_custom_call.1} parent=19 // pred_region
        %p210 = scmp.lt.s32.totalorder %s17, 1
        %s211 = scalar_select %p210, %s17, 1
        %p212 = scmp.lt.s32.totalorder %s19, 0
        %s213 = scalar_select %p212, %s19, 0
        %s214 = sadd.s32 %s213, %s211
        %s215 = smul.addr %s214, 8
        %s216 = scalar_lea.vmem %s3, %s215
      $region32: #{tpu_custom_call.1} parent=19 // pred_fallthru
        _
    $region20: #{tpu_custom_call.1} parent=5 // pred_fallthru
      _
    %p217 = scmp.le.s32.totalorder 1, %s10
    %p218 = scmp.lt.s32.totalorder %s10, 3
    %p219 = pnand %p217, %p218
    %p220 = pneg %p219
    // Predicated region
    $region33: #{tpu_custom_call.1} parent=5 // pred_check
      _
    $region34: #{tpu_custom_call.1} parent=5 // pred_check_branch
      %222 = sbr.rel (%p219) target = $region36
    $region35: #{tpu_custom_call.1} parent=5 // pred_region
      %s223 = ssub.s32 %s10, 1
      %p224 = pneg %p50
      %p225 = pneg %p47
      %p226 = scmp.lt.s32.totalorder %s20, 1
      %s227 = scalar_select %p226, %s20, 1
      %p228 = scmp.lt.s32.totalorder %s21, 0
      %s229 = scalar_select %p228, %s21, 0
      %s230 = sadd.s32 %s229, %s227
      %s231 = smul.addr %s230, 8
      %s232 = scalar_lea.vmem %s1, %s231
      %p233 = pneg %p78
      %p234 = pneg %p75
      %s235 = smul.u32 16, %s22
      %p236 = scmp.lt.s32.totalorder %s20, 1
      %s237 = scalar_select %p236, %s20, 1
      %p238 = scmp.lt.s32.totalorder %s235, 15
      %s239 = scalar_select %p238, %s235, 15
      %s240 = smul.addr %s237, 16
      %s241 = sadd.s32 %s239, %s240
      %s242 = smul.addr %s241, 8
      %s243 = scalar_lea.vmem %s2, %s242
      %p244 = pneg %p106
      %p245 = pneg %p103
      %p246 = scmp.lt.s32.totalorder %s20, 1
      %s247 = scalar_select %p246, %s20, 1
      %p248 = scmp.lt.s32.totalorder %s22, 0
      %s249 = scalar_select %p248, %s22, 0
      %s250 = sadd.s32 %s249, %s247
      %s251 = smul.addr %s250, 8
      %s252 = scalar_lea.vmem %s3, %s251
      %p253 = pneg %p134
      %p254 = pneg %p131
      %p255 = pneg %p162
      %p256 = pneg %p159
      %p257 = scmp.lt.s32.totalorder %s20, 1
      %s258 = scalar_select %p257, %s20, 1
      %p259 = scmp.lt.s32.totalorder %s21, 0
      %s260 = scalar_select %p259, %s21, 0
      %s261 = smul.addr %s258, 4
      %s262 = sadd.s32 %s260, %s261
      %s263 = smul.addr %s262, 8
      %s264 = scalar_lea.vmem %s4, %s263
      %p265 = scmp.lt.s32.totalorder %s20, 1
      %s266 = scalar_select %p265, %s20, 1
      %p267 = scmp.lt.s32.totalorder %s21, 0
      %s268 = scalar_select %p267, %s21, 0
      %s269 = sadd.s32 %s268, %s266
      %s270 = smul.addr %s269, 8
      %s271 = scalar_lea.vmem %s1, %s270
      %s272 = smul.u32 16, %s22
      %p273 = scmp.lt.s32.totalorder %s20, 1
      %s274 = scalar_select %p273, %s20, 1
      %p275 = scmp.lt.s32.totalorder %s272, 15
      %s276 = scalar_select %p275, %s272, 15
      %s277 = smul.addr %s274, 16
      %s278 = sadd.s32 %s276, %s277
      %s279 = smul.addr %s278, 8
      %s280 = scalar_lea.vmem %s2, %s279
      %s281 = smul.u32 16, %s22
      %p282 = scmp.lt.s32.totalorder %s20, 1
      %s283 = scalar_select %p282, %s20, 1
      %p284 = scmp.lt.s32.totalorder %s22, 0
      %s285 = scalar_select %p284, %s22, 0
      %s286 = sadd.s32 %s285, %s283
      %s287 = smul.addr %s286, 8
      %s288 = scalar_lea.vmem %s3, %s287
      %p289 = scmp.lt.s32.totalorder %s20, 1
      %s290 = scalar_select %p289, %s20, 1
      %p291 = scmp.lt.s32.totalorder %s21, 0
      %s292 = scalar_select %p291, %s21, 0
      %s293 = smul.addr %s290, 4
      %s294 = sadd.s32 %s292, %s293
      %s295 = smul.addr %s294, 8
      %s296 = scalar_lea.vmem %s4, %s295
      %p298 = scmp.eq.s32.totalorder %s22, 0
      // Predicated region
      $region37: #{tpu_custom_call.1} parent=35 // pred_check
        %p299 = pneg %p298
      $region38: #{tpu_custom_call.1} parent=35 // pred_check_branch
        %301 = sbr.rel (%p299) target = $region40
      $region39: #{tpu_custom_call.1} parent=35 // pred_region
        %302 = vst [vmem:[#allocation2] sm:$0xff] 0.0
        %303 = vst [vmem:[#allocation2 + $0x8] sm:$0xff] 0.0
        %304 = vst [vmem:[#allocation2 + $0x10] sm:$0xff] 0.0
        %305 = vst [vmem:[#allocation2 + $0x18] sm:$0xff] 0.0
        %306 = vst [vmem:[#allocation3] sm:$0x1] 0
        %v307 = vld [vmem:[%s288] sm:$0xff]
        %vm308 = vcmask 7168
        %309 = vst.msk [vmem:[#allocation4] sm:$0xff] %vm308, %v307
      $region40: #{tpu_custom_call.1} parent=35 // pred_fallthru
        _
      %v310 = vld [vmem:[%s271] sm:$0xff]
      %v311 = vld [vmem:[%s280] sm:$0xff]
      %v312 = vld [vmem:[%s280 + $0x8] sm:$0xff]
      %v313 = vld [vmem:[%s280 + $0x10] sm:$0xff]
      %v314 = vld [vmem:[%s280 + $0x18] sm:$0xff]
      %v315 = vld [vmem:[%s280 + $0x20] sm:$0xff]
      %v316 = vld [vmem:[%s280 + $0x28] sm:$0xff]
      %v317 = vld [vmem:[%s280 + $0x30] sm:$0xff]
      %v318 = vld [vmem:[%s280 + $0x38] sm:$0xff]
      %v319 = vld [vmem:[%s280 + $0x40] sm:$0xff]
      %v320 = vld [vmem:[%s280 + $0x48] sm:$0xff]
      %v321 = vld [vmem:[%s280 + $0x50] sm:$0xff]
      %v322 = vld [vmem:[%s280 + $0x58] sm:$0xff]
      %v323 = vld [vmem:[%s280 + $0x60] sm:$0xff]
      %v324 = vld [vmem:[%s280 + $0x68] sm:$0xff]
      %v325 = vld [vmem:[%s280 + $0x70] sm:$0xff]
      %v326 = vld [vmem:[%s280 + $0x78] sm:$0xff]
      %v327 = vld [vmem:[%s288] sm:$0xff]
      %v328 = vld [vmem:[%s0] sm:$0xf]
      %v329 = vld [vmem:[%s0 + $0x4] sm:$0xf]
      %v330 = vld [vmem:[%s0 + $0x8] sm:$0xf]
      %v331 = vld [vmem:[%s0 + $0xc] sm:$0xf]
      %v332 = vld [vmem:[%s0 + $0x10] sm:$0xf]
      %v333 = vld [vmem:[%s0 + $0x14] sm:$0xf]
      %v334 = vld [vmem:[%s0 + $0x18] sm:$0xf]
      %v335 = vld [vmem:[%s0 + $0x1c] sm:$0xf]
      %v336 = vld [vmem:[%s0 + $0x20] sm:$0xf]
      %v337 = vld [vmem:[%s0 + $0x24] sm:$0xf]
      %v338 = vld [vmem:[%s0 + $0x28] sm:$0xf]
      %v339 = vld [vmem:[%s0 + $0x2c] sm:$0xf]
      %v340 = vld [vmem:[%s0 + $0x30] sm:$0xf]
      %v341 = vld [vmem:[%s0 + $0x34] sm:$0xf]
      %v342 = vld [vmem:[%s0 + $0x38] sm:$0xf]
      %v343 = vld [vmem:[%s0 + $0x3c] sm:$0xf]
      %vm344 = vcmask 64512
      %v346 = vsel %vm344, %v311, 0
      %v349 = vsel %vm344, %v312, 0
      %v352 = vsel %vm344, %v313, 0
      %v355 = vsel %vm344, %v314, 0
      %v358 = vsel %vm344, %v315, 0
      %v361 = vsel %vm344, %v316, 0
      %v364 = vsel %vm344, %v317, 0
      %v367 = vsel %vm344, %v318, 0
      %v370 = vsel %vm344, %v319, 0
      %v373 = vsel %vm344, %v320, 0
      %v376 = vsel %vm344, %v321, 0
      %v379 = vsel %vm344, %v322, 0
      %v382 = vsel %vm344, %v323, 0
      %v385 = vsel %vm344, %v324, 0
      %v388 = vsel %vm344, %v325, 0
      %v391 = vsel %vm344, %v326, 0
      %393 = vmatprep.subr.mxu0 0.0
      %394 = vmatpush1.msra.mxu0 0.0
      %395 = vmatprep.subr.mxu0 0.0
      %396 = vmatpush1.msra.mxu0 0.0
      %397 = vmatprep.subr.mxu0 0.0
      %398 = vmatpush1.msra.mxu0 0.0
      %399 = vmatprep.subr.mxu0 0.0
      %400 = vmatpush1.msra.mxu0 0.0
      %401 = vmatprep.subr.mxu0 0.0
      %402 = vmatpush1.msra.mxu0 0.0
      %403 = vmatprep.subr.mxu0 0.0
      %404 = vmatpush1.msra.mxu0 0.0
      %405 = vmatprep.subr.mxu0 0.0
      %406 = vmatpush1.msra.mxu0 0.0
      %407 = vmatprep.subr.mxu0 0.0
      %408 = vmatpush1.msra.mxu0 0.0
      %409 = vmatprep.subr.mxu0 0.0
      %410 = vmatpush1.msra.mxu0 0.0
      %411 = vmatprep.subr.mxu0 0.0
      %412 = vmatpush1.msra.mxu0 0.0
      %413 = vmatprep.subr.mxu0 0.0
      %414 = vmatpush1.msra.mxu0 0.0
      %415 = vmatprep.subr.mxu0 0.0
      %416 = vmatpush1.msra.mxu0 0.0
      %417 = vmatprep.subr.mxu0 0.0
      %418 = vmatpush1.msra.mxu0 0.0
      %419 = vmatprep.subr.mxu0 0.0
      %420 = vmatpush1.msra.mxu0 0.0
      %421 = vmatprep.subr.mxu0 0.0
      %422 = vmatpush1.msra.mxu0 0.0
      %423 = vmatprep.subr.mxu0 0.0
      %424 = vmatpush1.msra.mxu0 %v310
      %425 = vmatprep.subr.mxu0 0.0
      %426 = vmatpush2.msra.mxu0 0.0
      %427 = vmatprep.subr.mxu0 0.0
      %428 = vmatpush2.msra.mxu0 0.0
      %429 = vmatprep.subr.mxu0 0.0
      %430 = vmatpush2.msra.mxu0 0.0
      %431 = vmatprep.subr.mxu0 0.0
      %432 = vmatpush2.msra.mxu0 0.0
      %433 = vmatprep.subr.mxu0 0.0
      %434 = vmatpush2.msra.mxu0 0.0
      %435 = vmatprep.subr.mxu0 0.0
      %436 = vmatpush2.msra.mxu0 0.0
      %437 = vmatprep.subr.mxu0 0.0
      %438 = vmatpush2.msra.mxu0 0.0
      %439 = vmatprep.subr.mxu0 0.0
      %440 = vmatpush2.msra.mxu0 0.0
      %441 = vmatprep.subr.mxu0 0.0
      %442 = vmatpush2.msra.mxu0 0.0
      %443 = vmatprep.subr.mxu0 0.0
      %444 = vmatpush2.msra.mxu0 0.0
      %445 = vmatprep.subr.mxu0 0.0
      %446 = vmatpush2.msra.mxu0 0.0
      %447 = vmatprep.subr.mxu0 0.0
      %448 = vmatpush2.msra.mxu0 0.0
      %449 = vmatprep.subr.mxu0 0.0
      %450 = vmatpush2.msra.mxu0 0.0
      %451 = vmatprep.subr.mxu0 0.0
      %452 = vmatpush2.msra.mxu0 0.0
      %453 = vmatprep.subr.mxu0 0.0
      %454 = vmatpush2.msra.mxu0 0.0
      %455 = vmatprep.subr.mxu0 0.0
      %456 = vmatpush2.msra.mxu0 0.0
      %457 = vmatprep.mubr.f32.mxu0 0.0
      %458 = vmatmul.mubr.f32.gmra.mxu0 %v346
      %v459 = vpop.f32.mrf.mxu0
      %v460 = vadd.f32 0.0, %v459
      %v461 = vpop.f32.mrf.mxu0
      %462 = vmatprep.mubr.f32.mxu0 0.0
      %463 = vmatmul.mubr.f32.gmra.mxu0 %v349
      %v464 = vpop.f32.mrf.mxu0
      %v465 = vadd.f32 0.0, %v464
      %v466 = vpop.f32.mrf.mxu0
      %467 = vmatprep.mubr.f32.mxu0 0.0
      %468 = vmatmul.mubr.f32.gmra.mxu0 %v352
      %v469 = vpop.f32.mrf.mxu0
      %v470 = vadd.f32 0.0, %v469
      %v471 = vpop.f32.mrf.mxu0
      %472 = vmatprep.mubr.f32.mxu0 0.0
      %473 = vmatmul.mubr.f32.gmra.mxu0 %v355
      %v474 = vpop.f32.mrf.mxu0
      %v475 = vadd.f32 0.0, %v474
      %v476 = vpop.f32.mrf.mxu0
      %477 = vmatprep.mubr.f32.mxu0 0.0
      %478 = vmatmul.mubr.f32.gmra.mxu0 %v358
      %v479 = vpop.f32.mrf.mxu0
      %v480 = vadd.f32 0.0, %v479
      %v481 = vpop.f32.mrf.mxu0
      %482 = vmatprep.mubr.f32.mxu0 0.0
      %483 = vmatmul.mubr.f32.gmra.mxu0 %v361
      %v484 = vpop.f32.mrf.mxu0
      %v485 = vadd.f32 0.0, %v484
      %v486 = vpop.f32.mrf.mxu0
      %487 = vmatprep.mubr.f32.mxu0 0.0
      %488 = vmatmul.mubr.f32.gmra.mxu0 %v364
      %v489 = vpop.f32.mrf.mxu0
      %v490 = vadd.f32 0.0, %v489
      %v491 = vpop.f32.mrf.mxu0
      %492 = vmatprep.mubr.f32.mxu0 0.0
      %493 = vmatmul.mubr.f32.gmra.mxu0 %v367
      %v494 = vpop.f32.mrf.mxu0
      %v495 = vadd.f32 0.0, %v494
      %v496 = vpop.f32.mrf.mxu0
      %497 = vmatprep.mubr.f32.mxu0 0.0
      %498 = vmatmul.mubr.f32.gmra.mxu0 %v370
      %v499 = vpop.f32.mrf.mxu0
      %v500 = vadd.f32 0.0, %v499
      %v501 = vpop.f32.mrf.mxu0
      %502 = vmatprep.mubr.f32.mxu0 0.0
      %503 = vmatmul.mubr.f32.gmra.mxu0 %v373
      %v504 = vpop.f32.mrf.mxu0
      %v505 = vadd.f32 0.0, %v504
      %v506 = vpop.f32.mrf.mxu0
      %507 = vmatprep.mubr.f32.mxu0 0.0
      %508 = vmatmul.mubr.f32.gmra.mxu0 %v376
      %v509 = vpop.f32.mrf.mxu0
      %v510 = vadd.f32 0.0, %v509
      %v511 = vpop.f32.mrf.mxu0
      %512 = vmatprep.mubr.f32.mxu0 0.0
      %513 = vmatmul.mubr.f32.gmra.mxu0 %v379
      %v514 = vpop.f32.mrf.mxu0
      %v515 = vadd.f32 0.0, %v514
      %v516 = vpop.f32.mrf.mxu0
      %517 = vmatprep.mubr.f32.mxu0 0.0
      %518 = vmatmul.mubr.f32.gmra.mxu0 %v382
      %v519 = vpop.f32.mrf.mxu0
      %v520 = vadd.f32 0.0, %v519
      %v521 = vpop.f32.mrf.mxu0
      %522 = vmatprep.mubr.f32.mxu0 0.0
      %523 = vmatmul.mubr.f32.gmra.mxu0 %v385
      %v524 = vpop.f32.mrf.mxu0
      %v525 = vadd.f32 0.0, %v524
      %v526 = vpop.f32.mrf.mxu0
      %527 = vmatprep.mubr.f32.mxu0 0.0
      %528 = vmatmul.mubr.f32.gmra.mxu0 %v388
      %v529 = vpop.f32.mrf.mxu0
      %v530 = vadd.f32 0.0, %v529
      %v531 = vpop.f32.mrf.mxu0
      %532 = vmatprep.mubr.f32.mxu0 0.0
      %533 = vmatmul.mubr.f32.gmra.mxu0 %v391
      %v534 = vpop.f32.mrf.mxu0
      %v535 = vadd.f32 0.0, %v534
      %v536 = vpop.f32.mrf.mxu0
      %537 = vdwg.mxu0
      %vm538 = vcmp.lt.f32.partialorder %v460, 0.36
      %vm539 = vcmp.lt.f32.partialorder %v465, 0.36
      %vm540 = vcmp.lt.f32.partialorder %v470, 0.36
      %vm541 = vcmp.lt.f32.partialorder %v475, 0.36
      %vm542 = vcmp.lt.f32.partialorder %v480, 0.36
      %vm543 = vcmp.lt.f32.partialorder %v485, 0.36
      %vm544 = vcmp.lt.f32.partialorder %v490, 0.36
      %vm545 = vcmp.lt.f32.partialorder %v495, 0.36
      %vm546 = vcmp.lt.f32.partialorder %v500, 0.36
      %vm547 = vcmp.lt.f32.partialorder %v505, 0.36
      %vm548 = vcmp.lt.f32.partialorder %v510, 0.36
      %vm549 = vcmp.lt.f32.partialorder %v515, 0.36
      %vm550 = vcmp.lt.f32.partialorder %v520, 0.36
      %vm551 = vcmp.lt.f32.partialorder %v525, 0.36
      %vm552 = vcmp.lt.f32.partialorder %v530, 0.36
      %vm553 = vcmp.lt.f32.partialorder %v535, 0.36
      %v554 = vsel %vm538, 1, 0
      %v555 = vsel %vm539, 1, 0
      %v556 = vsel %vm540, 1, 0
      %v557 = vsel %vm541, 1, 0
      %v558 = vsel %vm542, 1, 0
      %v559 = vsel %vm543, 1, 0
      %v560 = vsel %vm544, 1, 0
      %v561 = vsel %vm545, 1, 0
      %v562 = vsel %vm546, 1, 0
      %v563 = vsel %vm547, 1, 0
      %v564 = vsel %vm548, 1, 0
      %v565 = vsel %vm549, 1, 0
      %v566 = vsel %vm550, 1, 0
      %v567 = vsel %vm551, 1, 0
      %v568 = vsel %vm552, 1, 0
      %v569 = vsel %vm553, 1, 0
      %v570 = vcvt.s32.f32 %v554
      %v571 = vcvt.s32.f32 %v555
      %v572 = vcvt.s32.f32 %v556
      %v573 = vcvt.s32.f32 %v557
      %v574 = vcvt.s32.f32 %v558
      %v575 = vcvt.s32.f32 %v559
      %v576 = vcvt.s32.f32 %v560
      %v577 = vcvt.s32.f32 %v561
      %v578 = vcvt.s32.f32 %v562
      %v579 = vcvt.s32.f32 %v563
      %v580 = vcvt.s32.f32 %v564
      %v581 = vcvt.s32.f32 %v565
      %v582 = vcvt.s32.f32 %v566
      %v583 = vcvt.s32.f32 %v567
      %v584 = vcvt.s32.f32 %v568
      %v585 = vcvt.s32.f32 %v569
      %v586 = vpack.c.bf16 %v571, %v570
      %v587 = vpack.c.bf16 %v573, %v572
      %v588 = vpack.c.bf16 %v575, %v574
      %v589 = vpack.c.bf16 %v577, %v576
      %v590 = vpack.c.bf16 %v579, %v578
      %v591 = vpack.c.bf16 %v581, %v580
      %v592 = vpack.c.bf16 %v583, %v582
      %v593 = vpack.c.bf16 %v585, %v584
      %v610 = vunpack.c.l.b16 %v328
      %v611 = vunpack.c.l.b16 %v329
      %v612 = vunpack.c.l.b16 %v330
      %v613 = vunpack.c.l.b16 %v331
      %v614 = vunpack.c.l.b16 %v332
      %v615 = vunpack.c.l.b16 %v333
      %v616 = vunpack.c.l.b16 %v334
      %v617 = vunpack.c.l.b16 %v335
      %v618 = vunpack.c.l.b16 %v336
      %v619 = vunpack.c.l.b16 %v337
      %v620 = vunpack.c.l.b16 %v338
      %v621 = vunpack.c.l.b16 %v339
      %v622 = vunpack.c.l.b16 %v340
      %v623 = vunpack.c.l.b16 %v341
      %v624 = vunpack.c.l.b16 %v342
      %v625 = vunpack.c.l.b16 %v343
      %v626 = vpack.c.b16 %v611, %v610
      %v627 = vpack.c.b16 %v613, %v612
      %v628 = vpack.c.b16 %v615, %v614
      %v629 = vpack.c.b16 %v617, %v616
      %v630 = vpack.c.b16 %v619, %v618
      %v631 = vpack.c.b16 %v621, %v620
      %v632 = vpack.c.b16 %v623, %v622
      %v633 = vpack.c.b16 %v625, %v624
      %642 = vmatprep.subr.bf16.mxu0 0
      %643 = vmatpush1.bf16.msra.mxu0 %v593
      %644 = vmatprep.subr.bf16.mxu0 0
      %645 = vmatpush1.bf16.msra.mxu0 %v592
      %646 = vmatprep.subr.bf16.mxu0 0
      %647 = vmatpush1.bf16.msra.mxu0 %v591
      %648 = vmatprep.subr.bf16.mxu0 0
      %649 = vmatpush1.bf16.msra.mxu0 %v590
      %650 = vmatprep.subr.bf16.mxu0 0
      %651 = vmatpush1.bf16.msra.mxu0 %v589
      %652 = vmatprep.subr.bf16.mxu0 0
      %653 = vmatpush1.bf16.msra.mxu0 %v588
      %654 = vmatprep.subr.bf16.mxu0 0
      %655 = vmatpush1.bf16.msra.mxu0 %v587
      %656 = vmatprep.subr.bf16.mxu0 0
      %657 = vmatpush1.bf16.msra.mxu0 %v586
      %658 = vmatprep.subr.bf16.mxu0 0
      %659 = vmatpush2.bf16.msra.mxu0 0
      %660 = vmatprep.subr.bf16.mxu0 0
      %661 = vmatpush2.bf16.msra.mxu0 0
      %662 = vmatprep.subr.bf16.mxu0 0
      %663 = vmatpush2.bf16.msra.mxu0 0
      %664 = vmatprep.subr.bf16.mxu0 0
      %665 = vmatpush2.bf16.msra.mxu0 0
      %666 = vmatprep.subr.bf16.mxu0 0
      %667 = vmatpush2.bf16.msra.mxu0 0
      %668 = vmatprep.subr.bf16.mxu0 0
      %669 = vmatpush2.bf16.msra.mxu0 0
      %670 = vmatprep.subr.bf16.mxu0 0
      %671 = vmatpush2.bf16.msra.mxu0 0
      %672 = vmatprep.subr.bf16.mxu0 0
      %673 = vmatpush2.bf16.msra.mxu0 0
      %674 = vmatprep.mubr.bf16.mxu0 0
      %675 = vmatmul.mubr.bf16.gmra.mxu0 %v626
      %v676 = vpop.f32.mrf.mxu0
      %v677 = vadd.f32 0.0, %v676
      %v678 = vpop.f32.mrf.mxu0
      %v679 = vpop.f32.mrf.mxu0
      %v680 = vadd.f32 0.0, %v679
      %v681 = vpop.f32.mrf.mxu0
      %682 = vmatprep.mubr.bf16.mxu0 0
      %683 = vmatmul.mubr.bf16.gmra.mxu0 %v627
      %v684 = vpop.f32.mrf.mxu0
      %v685 = vadd.f32 0.0, %v684
      %v686 = vpop.f32.mrf.mxu0
      %v687 = vpop.f32.mrf.mxu0
      %v688 = vadd.f32 0.0, %v687
      %v689 = vpop.f32.mrf.mxu0
      %690 = vmatprep.mubr.bf16.mxu0 0
      %691 = vmatmul.mubr.bf16.gmra.mxu0 %v628
      %v692 = vpop.f32.mrf.mxu0
      %v693 = vadd.f32 0.0, %v692
      %v694 = vpop.f32.mrf.mxu0
      %v695 = vpop.f32.mrf.mxu0
      %v696 = vadd.f32 0.0, %v695
      %v697 = vpop.f32.mrf.mxu0
      %698 = vmatprep.mubr.bf16.mxu0 0
      %699 = vmatmul.mubr.bf16.gmra.mxu0 %v629
      %v700 = vpop.f32.mrf.mxu0
      %v701 = vadd.f32 0.0, %v700
      %v702 = vpop.f32.mrf.mxu0
      %v703 = vpop.f32.mrf.mxu0
      %v704 = vadd.f32 0.0, %v703
      %v705 = vpop.f32.mrf.mxu0
      %706 = vmatprep.mubr.bf16.mxu0 0
      %707 = vmatmul.mubr.bf16.gmra.mxu0 %v630
      %v708 = vpop.f32.mrf.mxu0
      %v709 = vadd.f32 0.0, %v708
      %v710 = vpop.f32.mrf.mxu0
      %v711 = vpop.f32.mrf.mxu0
      %v712 = vadd.f32 0.0, %v711
      %v713 = vpop.f32.mrf.mxu0
      %714 = vmatprep.mubr.bf16.mxu0 0
      %715 = vmatmul.mubr.bf16.gmra.mxu0 %v631
      %v716 = vpop.f32.mrf.mxu0
      %v717 = vadd.f32 0.0, %v716
      %v718 = vpop.f32.mrf.mxu0
      %v719 = vpop.f32.mrf.mxu0
      %v720 = vadd.f32 0.0, %v719
      %v721 = vpop.f32.mrf.mxu0
      %722 = vmatprep.mubr.bf16.mxu0 0
      %723 = vmatmul.mubr.bf16.gmra.mxu0 %v632
      %v724 = vpop.f32.mrf.mxu0
      %v725 = vadd.f32 0.0, %v724
      %v726 = vpop.f32.mrf.mxu0
      %v727 = vpop.f32.mrf.mxu0
      %v728 = vadd.f32 0.0, %v727
      %v729 = vpop.f32.mrf.mxu0
      %730 = vmatprep.mubr.bf16.mxu0 0
      %731 = vmatmul.mubr.bf16.gmra.mxu0 %v633
      %v732 = vpop.f32.mrf.mxu0
      %v733 = vadd.f32 0.0, %v732
      %v734 = vpop.f32.mrf.mxu0
      %v735 = vpop.f32.mrf.mxu0
      %v736 = vadd.f32 0.0, %v735
      %v737 = vpop.f32.mrf.mxu0
      %738 = vdwg.mxu0
      %v739 = vcvt.f32.s32.to.zero.pseudo %v677
      %v740 = vcvt.f32.s32.to.zero.pseudo %v680
      %v741 = vcvt.f32.s32.to.zero.pseudo %v685
      %v742 = vcvt.f32.s32.to.zero.pseudo %v688
      %v743 = vcvt.f32.s32.to.zero.pseudo %v693
      %v744 = vcvt.f32.s32.to.zero.pseudo %v696
      %v745 = vcvt.f32.s32.to.zero.pseudo %v701
      %v746 = vcvt.f32.s32.to.zero.pseudo %v704
      %v747 = vcvt.f32.s32.to.zero.pseudo %v709
      %v748 = vcvt.f32.s32.to.zero.pseudo %v712
      %v749 = vcvt.f32.s32.to.zero.pseudo %v717
      %v750 = vcvt.f32.s32.to.zero.pseudo %v720
      %v751 = vcvt.f32.s32.to.zero.pseudo %v725
      %v752 = vcvt.f32.s32.to.zero.pseudo %v728
      %v753 = vcvt.f32.s32.to.zero.pseudo %v733
      %v754 = vcvt.f32.s32.to.zero.pseudo %v736
      %v755 = vld [vmem:[#allocation3] sm:$0x1]
      %v756 = vlaneseq
      %v757 = vshrl.u32 %v756, 7
      %v758 = vsub.s32 0, %v757
      %v759 = vrot.slane %v755, %v758
      %v760 = vadd.s32 %v739, %v759
      %v761 = vadd.s32 %v740, %v759
      %v762 = vadd.s32 %v741, %v759
      %v763 = vadd.s32 %v742, %v759
      %v764 = vadd.s32 %v743, %v759
      %v765 = vadd.s32 %v744, %v759
      %v766 = vadd.s32 %v745, %v759
      %v767 = vadd.s32 %v746, %v759
      %v768 = vadd.s32 %v747, %v759
      %v769 = vadd.s32 %v748, %v759
      %v770 = vadd.s32 %v749, %v759
      %v771 = vadd.s32 %v750, %v759
      %v772 = vadd.s32 %v751, %v759
      %v773 = vadd.s32 %v752, %v759
      %v774 = vadd.s32 %v753, %v759
      %v775 = vadd.s32 %v754, %v759
      %v776 = vsel %vm538, %v760, 4294967295
      %v777 = vsel %vm539, %v761, 4294967295
      %v778 = vsel %vm540, %v762, 4294967295
      %v779 = vsel %vm541, %v763, 4294967295
      %v780 = vsel %vm542, %v764, 4294967295
      %v781 = vsel %vm543, %v765, 4294967295
      %v782 = vsel %vm544, %v766, 4294967295
      %v783 = vsel %vm545, %v767, 4294967295
      %v784 = vsel %vm546, %v768, 4294967295
      %v785 = vsel %vm547, %v769, 4294967295
      %v786 = vsel %vm548, %v770, 4294967295
      %v787 = vsel %vm549, %v771, 4294967295
      %v788 = vsel %vm550, %v772, 4294967295
      %v789 = vsel %vm551, %v773, 4294967295
      %v790 = vsel %vm552, %v774, 4294967295
      %v791 = vsel %vm553, %v775, 4294967295
      %vm792 = vcmp.eq.s32.totalorder %v776, 0
      %vm793 = vcmp.eq.s32.totalorder %v777, 0
      %vm794 = vcmp.eq.s32.totalorder %v778, 0
      %vm795 = vcmp.eq.s32.totalorder %v779, 0
      %vm796 = vcmp.eq.s32.totalorder %v780, 0
      %vm797 = vcmp.eq.s32.totalorder %v781, 0
      %vm798 = vcmp.eq.s32.totalorder %v782, 0
      %vm799 = vcmp.eq.s32.totalorder %v783, 0
      %vm800 = vcmp.eq.s32.totalorder %v784, 0
      %vm801 = vcmp.eq.s32.totalorder %v785, 0
      %vm802 = vcmp.eq.s32.totalorder %v786, 0
      %vm803 = vcmp.eq.s32.totalorder %v787, 0
      %vm804 = vcmp.eq.s32.totalorder %v788, 0
      %vm805 = vcmp.eq.s32.totalorder %v789, 0
      %vm806 = vcmp.eq.s32.totalorder %v790, 0
      %vm807 = vcmp.eq.s32.totalorder %v791, 0
      %v808 = vsel %vm792, 1, 0
      %v809 = vsel %vm793, 1, 0
      %v810 = vsel %vm794, 1, 0
      %v811 = vsel %vm795, 1, 0
      %v812 = vsel %vm796, 1, 0
      %v813 = vsel %vm797, 1, 0
      %v814 = vsel %vm798, 1, 0
      %v815 = vsel %vm799, 1, 0
      %v816 = vsel %vm800, 1, 0
      %v817 = vsel %vm801, 1, 0
      %v818 = vsel %vm802, 1, 0
      %v819 = vsel %vm803, 1, 0
      %v820 = vsel %vm804, 1, 0
      %v821 = vsel %vm805, 1, 0
      %v822 = vsel %vm806, 1, 0
      %v823 = vsel %vm807, 1, 0
      %v824 = vcvt.s32.f32 %v808
      %v825 = vcvt.s32.f32 %v809
      %v826 = vcvt.s32.f32 %v810
      %v827 = vcvt.s32.f32 %v811
      %v828 = vcvt.s32.f32 %v812
      %v829 = vcvt.s32.f32 %v813
      %v830 = vcvt.s32.f32 %v814
      %v831 = vcvt.s32.f32 %v815
      %v832 = vcvt.s32.f32 %v816
      %v833 = vcvt.s32.f32 %v817
      %v834 = vcvt.s32.f32 %v818
      %v835 = vcvt.s32.f32 %v819
      %v836 = vcvt.s32.f32 %v820
      %v837 = vcvt.s32.f32 %v821
      %v838 = vcvt.s32.f32 %v822
      %v839 = vcvt.s32.f32 %v823
      %v840 = vld [vmem:[#allocation2] sm:$0xff]
      %841 = vmatprep.subr.mxu0 0.0
      %842 = vmatpush1.msra.mxu0 %v839
      %843 = vmatprep.subr.mxu0 0.0
      %844 = vmatpush1.msra.mxu0 %v838
      %845 = vmatprep.subr.mxu0 0.0
      %846 = vmatpush1.msra.mxu0 %v837
      %847 = vmatprep.subr.mxu0 0.0
      %848 = vmatpush1.msra.mxu0 %v836
      %849 = vmatprep.subr.mxu0 0.0
      %850 = vmatpush1.msra.mxu0 %v835
      %851 = vmatprep.subr.mxu0 0.0
      %852 = vmatpush1.msra.mxu0 %v834
      %853 = vmatprep.subr.mxu0 0.0
      %854 = vmatpush1.msra.mxu0 %v833
      %855 = vmatprep.subr.mxu0 0.0
      %856 = vmatpush1.msra.mxu0 %v832
      %857 = vmatprep.subr.mxu0 0.0
      %858 = vmatpush1.msra.mxu0 %v831
      %859 = vmatprep.subr.mxu0 0.0
      %860 = vmatpush1.msra.mxu0 %v830
      %861 = vmatprep.subr.mxu0 0.0
      %862 = vmatpush1.msra.mxu0 %v829
      %863 = vmatprep.subr.mxu0 0.0
      %864 = vmatpush1.msra.mxu0 %v828
      %865 = vmatprep.subr.mxu0 0.0
      %866 = vmatpush1.msra.mxu0 %v827
      %867 = vmatprep.subr.mxu0 0.0
      %868 = vmatpush1.msra.mxu0 %v826
      %869 = vmatprep.subr.mxu0 0.0
      %870 = vmatpush1.msra.mxu0 %v825
      %871 = vmatprep.subr.mxu0 0.0
      %872 = vmatpush1.msra.mxu0 %v824
      %873 = vmatprep.subr.mxu0 0.0
      %874 = vmatpush2.msra.mxu0 0.0
      %875 = vmatprep.subr.mxu0 0.0
      %876 = vmatpush2.msra.mxu0 0.0
      %877 = vmatprep.subr.mxu0 0.0
      %878 = vmatpush2.msra.mxu0 0.0
      %879 = vmatprep.subr.mxu0 0.0
      %880 = vmatpush2.msra.mxu0 0.0
      %881 = vmatprep.subr.mxu0 0.0
      %882 = vmatpush2.msra.mxu0 0.0
      %883 = vmatprep.subr.mxu0 0.0
      %884 = vmatpush2.msra.mxu0 0.0
      %885 = vmatprep.subr.mxu0 0.0
      %886 = vmatpush2.msra.mxu0 0.0
      %887 = vmatprep.subr.mxu0 0.0
      %888 = vmatpush2.msra.mxu0 0.0
      %889 = vmatprep.subr.mxu0 0.0
      %890 = vmatpush2.msra.mxu0 0.0
      %891 = vmatprep.subr.mxu0 0.0
      %892 = vmatpush2.msra.mxu0 0.0
      %893 = vmatprep.subr.mxu0 0.0
      %894 = vmatpush2.msra.mxu0 0.0
      %895 = vmatprep.subr.mxu0 0.0
      %896 = vmatpush2.msra.mxu0 0.0
      %897 = vmatprep.subr.mxu0 0.0
      %898 = vmatpush2.msra.mxu0 0.0
      %899 = vmatprep.subr.mxu0 0.0
      %900 = vmatpush2.msra.mxu0 0.0
      %901 = vmatprep.subr.mxu0 0.0
      %902 = vmatpush2.msra.mxu0 0.0
      %903 = vmatprep.subr.mxu0 0.0
      %904 = vmatpush2.msra.mxu0 0.0
      %905 = vmatprep.mubr.f32.mxu0 0.0
      %906 = vmatmul.mubr.f32.gmra.mxu0 %v327
      %v907 = vpop.f32.mrf.mxu0
      %v908 = vadd.f32 0.0, %v907
      %v909 = vpop.f32.mrf.mxu0
      %910 = vdwg.mxu0
      %v911 = vadd.f32 %v840, %v908
      %912 = vst [vmem:[#allocation2] sm:$0xff] %v911
      %vm913 = vcmp.eq.s32.totalorder %v776, 1
      %vm914 = vcmp.eq.s32.totalorder %v777, 1
      %vm915 = vcmp.eq.s32.totalorder %v778, 1
      %vm916 = vcmp.eq.s32.totalorder %v779, 1
      %vm917 = vcmp.eq.s32.totalorder %v780, 1
      %vm918 = vcmp.eq.s32.totalorder %v781, 1
      %vm919 = vcmp.eq.s32.totalorder %v782, 1
      %vm920 = vcmp.eq.s32.totalorder %v783, 1
      %vm921 = vcmp.eq.s32.totalorder %v784, 1
      %vm922 = vcmp.eq.s32.totalorder %v785, 1
      %vm923 = vcmp.eq.s32.totalorder %v786, 1
      %vm924 = vcmp.eq.s32.totalorder %v787, 1
      %vm925 = vcmp.eq.s32.totalorder %v788, 1
      %vm926 = vcmp.eq.s32.totalorder %v789, 1
      %vm927 = vcmp.eq.s32.totalorder %v790, 1
      %vm928 = vcmp.eq.s32.totalorder %v791, 1
      %v929 = vsel %vm913, 1, 0
      %v930 = vsel %vm914, 1, 0
      %v931 = vsel %vm915, 1, 0
      %v932 = vsel %vm916, 1, 0
      %v933 = vsel %vm917, 1, 0
      %v934 = vsel %vm918, 1, 0
      %v935 = vsel %vm919, 1, 0
      %v936 = vsel %vm920, 1, 0
      %v937 = vsel %vm921, 1, 0
      %v938 = vsel %vm922, 1, 0
      %v939 = vsel %vm923, 1, 0
      %v940 = vsel %vm924, 1, 0
      %v941 = vsel %vm925, 1, 0
      %v942 = vsel %vm926, 1, 0
      %v943 = vsel %vm927, 1, 0
      %v944 = vsel %vm928, 1, 0
      %v945 = vcvt.s32.f32 %v929
      %v946 = vcvt.s32.f32 %v930
      %v947 = vcvt.s32.f32 %v931
      %v948 = vcvt.s32.f32 %v932
      %v949 = vcvt.s32.f32 %v933
      %v950 = vcvt.s32.f32 %v934
      %v951 = vcvt.s32.f32 %v935
      %v952 = vcvt.s32.f32 %v936
      %v953 = vcvt.s32.f32 %v937
      %v954 = vcvt.s32.f32 %v938
      %v955 = vcvt.s32.f32 %v939
      %v956 = vcvt.s32.f32 %v940
      %v957 = vcvt.s32.f32 %v941
      %v958 = vcvt.s32.f32 %v942
      %v959 = vcvt.s32.f32 %v943
      %v960 = vcvt.s32.f32 %v944
      %v961 = vld [vmem:[#allocation2 + $0x8] sm:$0xff]
      %962 = vmatprep.subr.mxu0 0.0
      %963 = vmatpush1.msra.mxu0 %v960
      %964 = vmatprep.subr.mxu0 0.0
      %965 = vmatpush1.msra.mxu0 %v959
      %966 = vmatprep.subr.mxu0 0.0
      %967 = vmatpush1.msra.mxu0 %v958
      %968 = vmatprep.subr.mxu0 0.0
      %969 = vmatpush1.msra.mxu0 %v957
      %970 = vmatprep.subr.mxu0 0.0
      %971 = vmatpush1.msra.mxu0 %v956
      %972 = vmatprep.subr.mxu0 0.0
      %973 = vmatpush1.msra.mxu0 %v955
      %974 = vmatprep.subr.mxu0 0.0
      %975 = vmatpush1.msra.mxu0 %v954
      %976 = vmatprep.subr.mxu0 0.0
      %977 = vmatpush1.msra.mxu0 %v953
      %978 = vmatprep.subr.mxu0 0.0
      %979 = vmatpush1.msra.mxu0 %v952
      %980 = vmatprep.subr.mxu0 0.0
      %981 = vmatpush1.msra.mxu0 %v951
      %982 = vmatprep.subr.mxu0 0.0
      %983 = vmatpush1.msra.mxu0 %v950
      %984 = vmatprep.subr.mxu0 0.0
      %985 = vmatpush1.msra.mxu0 %v949
      %986 = vmatprep.subr.mxu0 0.0
      %987 = vmatpush1.msra.mxu0 %v948
      %988 = vmatprep.subr.mxu0 0.0
      %989 = vmatpush1.msra.mxu0 %v947
      %990 = vmatprep.subr.mxu0 0.0
      %991 = vmatpush1.msra.mxu0 %v946
      %992 = vmatprep.subr.mxu0 0.0
      %993 = vmatpush1.msra.mxu0 %v945
      %994 = vmatprep.subr.mxu0 0.0
      %995 = vmatpush2.msra.mxu0 0.0
      %996 = vmatprep.subr.mxu0 0.0
      %997 = vmatpush2.msra.mxu0 0.0
      %998 = vmatprep.subr.mxu0 0.0
      %999 = vmatpush2.msra.mxu0 0.0
      %1000 = vmatprep.subr.mxu0 0.0
      %1001 = vmatpush2.msra.mxu0 0.0
      %1002 = vmatprep.subr.mxu0 0.0
      %1003 = vmatpush2.msra.mxu0 0.0
      %1004 = vmatprep.subr.mxu0 0.0
      %1005 = vmatpush2.msra.mxu0 0.0
      %1006 = vmatprep.subr.mxu0 0.0
      %1007 = vmatpush2.msra.mxu0 0.0
      %1008 = vmatprep.subr.mxu0 0.0
      %1009 = vmatpush2.msra.mxu0 0.0
      %1010 = vmatprep.subr.mxu0 0.0
      %1011 = vmatpush2.msra.mxu0 0.0
      %1012 = vmatprep.subr.mxu0 0.0
      %1013 = vmatpush2.msra.mxu0 0.0
      %1014 = vmatprep.subr.mxu0 0.0
      %1015 = vmatpush2.msra.mxu0 0.0
      %1016 = vmatprep.subr.mxu0 0.0
      %1017 = vmatpush2.msra.mxu0 0.0
      %1018 = vmatprep.subr.mxu0 0.0
      %1019 = vmatpush2.msra.mxu0 0.0
      %1020 = vmatprep.subr.mxu0 0.0
      %1021 = vmatpush2.msra.mxu0 0.0
      %1022 = vmatprep.subr.mxu0 0.0
      %1023 = vmatpush2.msra.mxu0 0.0
      %1024 = vmatprep.subr.mxu0 0.0
      %1025 = vmatpush2.msra.mxu0 0.0
      %1026 = vmatprep.mubr.f32.mxu0 0.0
      %1027 = vmatmul.mubr.f32.gmra.mxu0 %v327
      %v1028 = vpop.f32.mrf.mxu0
      %v1029 = vadd.f32 0.0, %v1028
      %v1030 = vpop.f32.mrf.mxu0
      %1031 = vdwg.mxu0
      %v1032 = vadd.f32 %v961, %v1029
      %1033 = vst [vmem:[#allocation2 + $0x8] sm:$0xff] %v1032
      %vm1034 = vcmp.eq.s32.totalorder %v776, 2
      %vm1035 = vcmp.eq.s32.totalorder %v777, 2
      %vm1036 = vcmp.eq.s32.totalorder %v778, 2
      %vm1037 = vcmp.eq.s32.totalorder %v779, 2
      %vm1038 = vcmp.eq.s32.totalorder %v780, 2
      %vm1039 = vcmp.eq.s32.totalorder %v781, 2
      %vm1040 = vcmp.eq.s32.totalorder %v782, 2
      %vm1041 = vcmp.eq.s32.totalorder %v783, 2
      %vm1042 = vcmp.eq.s32.totalorder %v784, 2
      %vm1043 = vcmp.eq.s32.totalorder %v785, 2
      %vm1044 = vcmp.eq.s32.totalorder %v786, 2
      %vm1045 = vcmp.eq.s32.totalorder %v787, 2
      %vm1046 = vcmp.eq.s32.totalorder %v788, 2
      %vm1047 = vcmp.eq.s32.totalorder %v789, 2
      %vm1048 = vcmp.eq.s32.totalorder %v790, 2
      %vm1049 = vcmp.eq.s32.totalorder %v791, 2
      %v1050 = vsel %vm1034, 1, 0
      %v1051 = vsel %vm1035, 1, 0
      %v1052 = vsel %vm1036, 1, 0
      %v1053 = vsel %vm1037, 1, 0
      %v1054 = vsel %vm1038, 1, 0
      %v1055 = vsel %vm1039, 1, 0
      %v1056 = vsel %vm1040, 1, 0
      %v1057 = vsel %vm1041, 1, 0
      %v1058 = vsel %vm1042, 1, 0
      %v1059 = vsel %vm1043, 1, 0
      %v1060 = vsel %vm1044, 1, 0
      %v1061 = vsel %vm1045, 1, 0
      %v1062 = vsel %vm1046, 1, 0
      %v1063 = vsel %vm1047, 1, 0
      %v1064 = vsel %vm1048, 1, 0
      %v1065 = vsel %vm1049, 1, 0
      %v1066 = vcvt.s32.f32 %v1050
      %v1067 = vcvt.s32.f32 %v1051
      %v1068 = vcvt.s32.f32 %v1052
      %v1069 = vcvt.s32.f32 %v1053
      %v1070 = vcvt.s32.f32 %v1054
      %v1071 = vcvt.s32.f32 %v1055
      %v1072 = vcvt.s32.f32 %v1056
      %v1073 = vcvt.s32.f32 %v1057
      %v1074 = vcvt.s32.f32 %v1058
      %v1075 = vcvt.s32.f32 %v1059
      %v1076 = vcvt.s32.f32 %v1060
      %v1077 = vcvt.s32.f32 %v1061
      %v1078 = vcvt.s32.f32 %v1062
      %v1079 = vcvt.s32.f32 %v1063
      %v1080 = vcvt.s32.f32 %v1064
      %v1081 = vcvt.s32.f32 %v1065
      %v1082 = vld [vmem:[#allocation2 + $0x10] sm:$0xff]
      %1083 = vmatprep.subr.mxu0 0.0
      %1084 = vmatpush1.msra.mxu0 %v1081
      %1085 = vmatprep.subr.mxu0 0.0
      %1086 = vmatpush1.msra.mxu0 %v1080
      %1087 = vmatprep.subr.mxu0 0.0
      %1088 = vmatpush1.msra.mxu0 %v1079
      %1089 = vmatprep.subr.mxu0 0.0
      %1090 = vmatpush1.msra.mxu0 %v1078
      %1091 = vmatprep.subr.mxu0 0.0
      %1092 = vmatpush1.msra.mxu0 %v1077
      %1093 = vmatprep.subr.mxu0 0.0
      %1094 = vmatpush1.msra.mxu0 %v1076
      %1095 = vmatprep.subr.mxu0 0.0
      %1096 = vmatpush1.msra.mxu0 %v1075
      %1097 = vmatprep.subr.mxu0 0.0
      %1098 = vmatpush1.msra.mxu0 %v1074
      %1099 = vmatprep.subr.mxu0 0.0
      %1100 = vmatpush1.msra.mxu0 %v1073
      %1101 = vmatprep.subr.mxu0 0.0
      %1102 = vmatpush1.msra.mxu0 %v1072
      %1103 = vmatprep.subr.mxu0 0.0
      %1104 = vmatpush1.msra.mxu0 %v1071
      %1105 = vmatprep.subr.mxu0 0.0
      %1106 = vmatpush1.msra.mxu0 %v1070
      %1107 = vmatprep.subr.mxu0 0.0
      %1108 = vmatpush1.msra.mxu0 %v1069
      %1109 = vmatprep.subr.mxu0 0.0
      %1110 = vmatpush1.msra.mxu0 %v1068
      %1111 = vmatprep.subr.mxu0 0.0
      %1112 = vmatpush1.msra.mxu0 %v1067
      %1113 = vmatprep.subr.mxu0 0.0
      %1114 = vmatpush1.msra.mxu0 %v1066
      %1115 = vmatprep.subr.mxu0 0.0
      %1116 = vmatpush2.msra.mxu0 0.0
      %1117 = vmatprep.subr.mxu0 0.0
      %1118 = vmatpush2.msra.mxu0 0.0
      %1119 = vmatprep.subr.mxu0 0.0
      %1120 = vmatpush2.msra.mxu0 0.0
      %1121 = vmatprep.subr.mxu0 0.0
      %1122 = vmatpush2.msra.mxu0 0.0
      %1123 = vmatprep.subr.mxu0 0.0
      %1124 = vmatpush2.msra.mxu0 0.0
      %1125 = vmatprep.subr.mxu0 0.0
      %1126 = vmatpush2.msra.mxu0 0.0
      %1127 = vmatprep.subr.mxu0 0.0
      %1128 = vmatpush2.msra.mxu0 0.0
      %1129 = vmatprep.subr.mxu0 0.0
      %1130 = vmatpush2.msra.mxu0 0.0
      %1131 = vmatprep.subr.mxu0 0.0
      %1132 = vmatpush2.msra.mxu0 0.0
      %1133 = vmatprep.subr.mxu0 0.0
      %1134 = vmatpush2.msra.mxu0 0.0
      %1135 = vmatprep.subr.mxu0 0.0
      %1136 = vmatpush2.msra.mxu0 0.0
      %1137 = vmatprep.subr.mxu0 0.0
      %1138 = vmatpush2.msra.mxu0 0.0
      %1139 = vmatprep.subr.mxu0 0.0
      %1140 = vmatpush2.msra.mxu0 0.0
      %1141 = vmatprep.subr.mxu0 0.0
      %1142 = vmatpush2.msra.mxu0 0.0
      %1143 = vmatprep.subr.mxu0 0.0
      %1144 = vmatpush2.msra.mxu0 0.0
      %1145 = vmatprep.subr.mxu0 0.0
      %1146 = vmatpush2.msra.mxu0 0.0
      %1147 = vmatprep.mubr.f32.mxu0 0.0
      %1148 = vmatmul.mubr.f32.gmra.mxu0 %v327
      %v1149 = vpop.f32.mrf.mxu0
      %v1150 = vadd.f32 0.0, %v1149
      %v1151 = vpop.f32.mrf.mxu0
      %1152 = vdwg.mxu0
      %v1153 = vadd.f32 %v1082, %v1150
      %1154 = vst [vmem:[#allocation2 + $0x10] sm:$0xff] %v1153
      %vm1155 = vcmp.eq.s32.totalorder %v776, 3
      %vm1156 = vcmp.eq.s32.totalorder %v777, 3
      %vm1157 = vcmp.eq.s32.totalorder %v778, 3
      %vm1158 = vcmp.eq.s32.totalorder %v779, 3
      %vm1159 = vcmp.eq.s32.totalorder %v780, 3
      %vm1160 = vcmp.eq.s32.totalorder %v781, 3
      %vm1161 = vcmp.eq.s32.totalorder %v782, 3
      %vm1162 = vcmp.eq.s32.totalorder %v783, 3
      %vm1163 = vcmp.eq.s32.totalorder %v784, 3
      %vm1164 = vcmp.eq.s32.totalorder %v785, 3
      %vm1165 = vcmp.eq.s32.totalorder %v786, 3
      %vm1166 = vcmp.eq.s32.totalorder %v787, 3
      %vm1167 = vcmp.eq.s32.totalorder %v788, 3
      %vm1168 = vcmp.eq.s32.totalorder %v789, 3
      %vm1169 = vcmp.eq.s32.totalorder %v790, 3
      %vm1170 = vcmp.eq.s32.totalorder %v791, 3
      %v1171 = vsel %vm1155, 1, 0
      %v1172 = vsel %vm1156, 1, 0
      %v1173 = vsel %vm1157, 1, 0
      %v1174 = vsel %vm1158, 1, 0
      %v1175 = vsel %vm1159, 1, 0
      %v1176 = vsel %vm1160, 1, 0
      %v1177 = vsel %vm1161, 1, 0
      %v1178 = vsel %vm1162, 1, 0
      %v1179 = vsel %vm1163, 1, 0
      %v1180 = vsel %vm1164, 1, 0
      %v1181 = vsel %vm1165, 1, 0
      %v1182 = vsel %vm1166, 1, 0
      %v1183 = vsel %vm1167, 1, 0
      %v1184 = vsel %vm1168, 1, 0
      %v1185 = vsel %vm1169, 1, 0
      %v1186 = vsel %vm1170, 1, 0
      %v1187 = vcvt.s32.f32 %v1171
      %v1188 = vcvt.s32.f32 %v1172
      %v1189 = vcvt.s32.f32 %v1173
      %v1190 = vcvt.s32.f32 %v1174
      %v1191 = vcvt.s32.f32 %v1175
      %v1192 = vcvt.s32.f32 %v1176
      %v1193 = vcvt.s32.f32 %v1177
      %v1194 = vcvt.s32.f32 %v1178
      %v1195 = vcvt.s32.f32 %v1179
      %v1196 = vcvt.s32.f32 %v1180
      %v1197 = vcvt.s32.f32 %v1181
      %v1198 = vcvt.s32.f32 %v1182
      %v1199 = vcvt.s32.f32 %v1183
      %v1200 = vcvt.s32.f32 %v1184
      %v1201 = vcvt.s32.f32 %v1185
      %v1202 = vcvt.s32.f32 %v1186
      %v1203 = vld [vmem:[#allocation2 + $0x18] sm:$0xff]
      %1204 = vmatprep.subr.mxu0 0.0
      %1205 = vmatpush1.msra.mxu0 %v1202
      %1206 = vmatprep.subr.mxu0 0.0
      %1207 = vmatpush1.msra.mxu0 %v1201
      %1208 = vmatprep.subr.mxu0 0.0
      %1209 = vmatpush1.msra.mxu0 %v1200
      %1210 = vmatprep.subr.mxu0 0.0
      %1211 = vmatpush1.msra.mxu0 %v1199
      %1212 = vmatprep.subr.mxu0 0.0
      %1213 = vmatpush1.msra.mxu0 %v1198
      %1214 = vmatprep.subr.mxu0 0.0
      %1215 = vmatpush1.msra.mxu0 %v1197
      %1216 = vmatprep.subr.mxu0 0.0
      %1217 = vmatpush1.msra.mxu0 %v1196
      %1218 = vmatprep.subr.mxu0 0.0
      %1219 = vmatpush1.msra.mxu0 %v1195
      %1220 = vmatprep.subr.mxu0 0.0
      %1221 = vmatpush1.msra.mxu0 %v1194
      %1222 = vmatprep.subr.mxu0 0.0
      %1223 = vmatpush1.msra.mxu0 %v1193
      %1224 = vmatprep.subr.mxu0 0.0
      %1225 = vmatpush1.msra.mxu0 %v1192
      %1226 = vmatprep.subr.mxu0 0.0
      %1227 = vmatpush1.msra.mxu0 %v1191
      %1228 = vmatprep.subr.mxu0 0.0
      %1229 = vmatpush1.msra.mxu0 %v1190
      %1230 = vmatprep.subr.mxu0 0.0
      %1231 = vmatpush1.msra.mxu0 %v1189
      %1232 = vmatprep.subr.mxu0 0.0
      %1233 = vmatpush1.msra.mxu0 %v1188
      %1234 = vmatprep.subr.mxu0 0.0
      %1235 = vmatpush1.msra.mxu0 %v1187
      %1236 = vmatprep.subr.mxu0 0.0
      %1237 = vmatpush2.msra.mxu0 0.0
      %1238 = vmatprep.subr.mxu0 0.0
      %1239 = vmatpush2.msra.mxu0 0.0
      %1240 = vmatprep.subr.mxu0 0.0
      %1241 = vmatpush2.msra.mxu0 0.0
      %1242 = vmatprep.subr.mxu0 0.0
      %1243 = vmatpush2.msra.mxu0 0.0
      %1244 = vmatprep.subr.mxu0 0.0
      %1245 = vmatpush2.msra.mxu0 0.0
      %1246 = vmatprep.subr.mxu0 0.0
      %1247 = vmatpush2.msra.mxu0 0.0
      %1248 = vmatprep.subr.mxu0 0.0
      %1249 = vmatpush2.msra.mxu0 0.0
      %1250 = vmatprep.subr.mxu0 0.0
      %1251 = vmatpush2.msra.mxu0 0.0
      %1252 = vmatprep.subr.mxu0 0.0
      %1253 = vmatpush2.msra.mxu0 0.0
      %1254 = vmatprep.subr.mxu0 0.0
      %1255 = vmatpush2.msra.mxu0 0.0
      %1256 = vmatprep.subr.mxu0 0.0
      %1257 = vmatpush2.msra.mxu0 0.0
      %1258 = vmatprep.subr.mxu0 0.0
      %1259 = vmatpush2.msra.mxu0 0.0
      %1260 = vmatprep.subr.mxu0 0.0
      %1261 = vmatpush2.msra.mxu0 0.0
      %1262 = vmatprep.subr.mxu0 0.0
      %1263 = vmatpush2.msra.mxu0 0.0
      %1264 = vmatprep.subr.mxu0 0.0
      %1265 = vmatpush2.msra.mxu0 0.0
      %1266 = vmatprep.subr.mxu0 0.0
      %1267 = vmatpush2.msra.mxu0 0.0
      %1268 = vmatprep.mubr.f32.mxu0 0.0
      %1269 = vmatmul.mubr.f32.gmra.mxu0 %v327
      %v1270 = vpop.f32.mrf.mxu0
      %v1271 = vadd.f32 0.0, %v1270
      %v1272 = vpop.f32.mrf.mxu0
      %1273 = vdwg.mxu0
      %v1274 = vadd.f32 %v1203, %v1271
      %1275 = vst [vmem:[#allocation2 + $0x18] sm:$0xff] %v1274
      %v1276 = vld [vmem:[#allocation3] sm:$0x1]
      %v1277 = vadd.s32 %v554, %v558
      %v1278 = vadd.s32 %v555, %v559
      %v1279 = vadd.s32 %v556, %v560
      %v1280 = vadd.s32 %v557, %v561
      %v1281 = vadd.s32 %v1277, %v562
      %v1282 = vadd.s32 %v1278, %v563
      %v1283 = vadd.s32 %v1279, %v564
      %v1284 = vadd.s32 %v1280, %v565
      %v1285 = vadd.s32 %v1281, %v566
      %v1286 = vadd.s32 %v1282, %v567
      %v1287 = vadd.s32 %v1283, %v568
      %v1288 = vadd.s32 %v1284, %v569
      %v1289 = vadd.s32 %v1285, %v1286
      %v1290 = vadd.s32 %v1287, %v1288
      %v1291 = vadd.s32 %v1289, %v1290
      %v1292 = vrot.slane %v1291, 4
      %v1293 = vadd.s32 %v1291, %v1292
      %v1294 = vrot.slane %v1293, 2
      %v1295 = vadd.s32 %v1293, %v1294
      %v1296 = vrot.slane %v1295, 1
      %v1297 = vadd.s32 %v1295, %v1296
      %v1298 = vadd.s32 %v1276, %v1297
      %1299 = vst [vmem:[#allocation3] sm:$0x1] %v1298
      // Predicated region
      $region41: #{tpu_custom_call.1} parent=35 // pred_check
        %p1300 = pneg %p298
      $region42: #{tpu_custom_call.1} parent=35 // pred_check_branch
        %1302 = sbr.rel (%p1300) target = $region44
      $region43: #{tpu_custom_call.1} parent=35 // pred_region
        %v1303 = vld [vmem:[#allocation4] sm:$0x7f]
        %v1304 = vld [vmem:[#allocation2] sm:$0x7f]
        %v1305 = vld [vmem:[#allocation2 + $0x7] ss:$0 sm:$0xff]
        %vm1306 = vcmp.gt.f32.partialorder %v1305, 0.5
        %v1307 = vsel %vm1306, 1, 0
        %vm1308 = vcmp.eq.s32.totalorder %v1307, 1
        %1310 = vset.pattern.permute.xlu0 0
        %1311 = vperm.xlu0 %1310, %v1303
        %v1312 = vpop.permute.xlu0 %1311
        %v1314 = vsel %vm1308, %v1304, %v1312
        %v1315 = vld [vmem:[#allocation2 + $0x8] sm:$0x7f]
        %v1316 = vld [vmem:[#allocation2 + $0xf] ss:$0 sm:$0xff]
        %vm1317 = vcmp.gt.f32.partialorder %v1316, 0.5
        %v1318 = vsel %vm1317, 1, 0
        %vm1319 = vcmp.eq.s32.totalorder %v1318, 1
        %v1320 = vsel %vm1319, %v1315, %v1314
        %v1321 = vld [vmem:[#allocation2 + $0x10] sm:$0x7f]
        %v1322 = vld [vmem:[#allocation2 + $0x17] ss:$0 sm:$0xff]
        %vm1323 = vcmp.gt.f32.partialorder %v1322, 0.5
        %v1324 = vsel %vm1323, 1, 0
        %vm1325 = vcmp.eq.s32.totalorder %v1324, 1
        %v1326 = vsel %vm1325, %v1321, %v1314
        %v1327 = vld [vmem:[#allocation2 + $0x18] sm:$0x7f]
        %v1328 = vld [vmem:[#allocation2 + $0x1f] ss:$0 sm:$0xff]
        %vm1329 = vcmp.gt.f32.partialorder %v1328, 0.5
        %v1330 = vsel %vm1329, 1, 0
        %vm1331 = vcmp.eq.s32.totalorder %v1330, 1
        %v1332 = vsel %vm1331, %v1327, %v1314
        %1333 = vst [vmem:[%s296] sm:$0x7f] %v1314
        %1334 = vst [vmem:[%s296 + $0x8] sm:$0x7f] %v1320
        %1335 = vst [vmem:[%s296 + $0x10] sm:$0x7f] %v1326
        %1336 = vst [vmem:[%s296 + $0x18] sm:$0x7f] %v1332
      $region44: #{tpu_custom_call.1} parent=35 // pred_fallthru
        _
      %p1337 = scmp.lt.s32.totalorder %s20, 1
      %s1338 = scalar_select %p1337, %s20, 1
      %p1339 = scmp.lt.s32.totalorder %s21, 0
      %s1340 = scalar_select %p1339, %s21, 0
      %s1341 = smul.addr %s1338, 4
      %s1342 = sadd.s32 %s1340, %s1341
      %s1343 = smul.addr %s1342, 8
      %s1344 = scalar_lea.vmem %s4, %s1343
      // Predicated region
      $region45: #{tpu_custom_call.1} parent=35 // pred_check
        %p1345 = pneg %p159
      $region46: #{tpu_custom_call.1} parent=35 // pred_check_branch
        %1347 = sbr.rel (%p1345) target = $region48
      $region47: #{tpu_custom_call.1} parent=35 // pred_region
        _
      $region48: #{tpu_custom_call.1} parent=35 // pred_fallthru
        _
    $region36: #{tpu_custom_call.1} parent=5 // pred_fallthru
      _
    %p1348 = scmp.le.s32.totalorder 2, %s10
    // Predicated region
    $region49: #{tpu_custom_call.1} parent=5 // pred_check
      %p1349 = pneg %p1348
    $region50: #{tpu_custom_call.1} parent=5 // pred_check_branch
      %1351 = sbr.rel (%p1349) target = $region52
    $region51: #{tpu_custom_call.1} parent=5 // pred_region
      %s1352 = ssub.s32 %s10, 2
      // Predicated region
      $region53: #{tpu_custom_call.1} parent=51 // pred_check
        %p1353 = pneg %p165
      $region54: #{tpu_custom_call.1} parent=51 // pred_check_branch
        %1355 = sbr.rel (%p1353) target = $region56
      $region55: #{tpu_custom_call.1} parent=51 // pred_region
        %p1356 = scmp.lt.s32.totalorder %s23, 1
        %s1357 = scalar_select %p1356, %s23, 1
        %p1358 = scmp.lt.s32.totalorder %s24, 0
        %s1359 = scalar_select %p1358, %s24, 0
        %s1360 = smul.addr %s1357, 4
        %s1361 = sadd.s32 %s1359, %s1360
        %s1362 = smul.addr %s1361, 8
        %s1363 = scalar_lea.vmem %s4, %s1362
      $region56: #{tpu_custom_call.1} parent=51 // pred_fallthru
        _
    $region52: #{tpu_custom_call.1} parent=5 // pred_fallthru
      _
  $region6: #{tpu_custom_call.1} parent=0 // loop_footer
    %s14 = sadd.s32 1, %s10
  $region7: #{tpu_custom_call.1} parent=0 // loop_footer_branch
    %9 = sbr.rel target = $region3
  $region8: #{tpu_custom_call.1} parent=0 // loop_exit
    _

</llo_original>
